<compile_context>
chip_gen: v6e
topology: v6e:2x2x1
jax: 0.10.0
libtpu: 0.0.40
codegen_flags: <defaults>
</compile_context>

<pallas_src>
import functools
import math

import numpy as np
import jax
import jax.numpy as jnp
from jax import lax
from jax.experimental import pallas as pl
from jax.experimental.pallas import tpu as pltpu


def _round_up(n, m):
    return ((n + m - 1) // m) * m


def make_rnn_kernel(num_layers, T, t_chunk, Bp, Hp, use_bf16):
    """Kernel over padded, time-major tensors; grid = (ceil(T/t_chunk),).

    Ref order (inputs, outputs, scratch):
      x          : (t_chunk*Bp, D)  current time-chunk, flattened time-major
      per layer l (0..L-1):
        w_ih_t_l : (in_dim, Hp)     input weight, transposed (in_dim=D for l=0)
        w_hh_t_l : (Hp, Hp)         recurrent weight, transposed
        b_l      : (1, Hp)          folded bias (b_ih + b_hh), f32
      fc_w_t     : (Hp, 128)        head weight (col 0 real, rest zero)
      fc_b       : (1, 128)
      out        : (Bp, 128)        head output (col 0 real) [written last chunk]
      h_out      : (L, Bp, Hp)      final hidden per layer   [written last chunk]
      xproj      : (t_chunk*Bp, Hp) scratch: hoisted layer-0 projection (chunk)
      h_state    : (L, Bp, Hp)      scratch: hidden state carried across chunks
    """
    act_dt = jnp.bfloat16 if use_bf16 else jnp.float32
    needs_mask = (T % t_chunk) != 0   # zero-padded timesteps must not update h

    def kernel(*refs):
        x_ref = refs[0]
        layer_refs = [(refs[1 + 3 * l], refs[2 + 3 * l], refs[3 + 3 * l])
                      for l in range(num_layers)]
        n_w = 3 * num_layers
        fc_w_t, fc_b = refs[1 + n_w], refs[2 + n_w]
        out_ref, h_out_ref = refs[3 + n_w], refs[4 + n_w]
        xproj, h_state = refs[5 + n_w], refs[6 + n_w]

        c = pl.program_id(0)

        # h_0 = zeros (PyTorch default when no initial hidden state is given).
        @pl.when(c == 0)
        def _():
            h_state[...] = jnp.zeros_like(h_state)

        # ---- layer-0 input projection for the whole chunk, off the serial path
        w_ih0_t, w_hh0_t, b0 = layer_refs[0]
        xproj[...] = (jnp.dot(x_ref[...], w_ih0_t[...],
                              preferred_element_type=jnp.float32)
                      + b0[...])

        # Loop-invariant bias broadcasts for deep layers (stay in vregs).
        deep_bias = [jnp.broadcast_to(layer_refs[l][2][...], (Bp, Hp))
                     for l in range(1, num_layers)]

        hs0 = tuple(h_state[l] for l in range(num_layers))
        base = c * t_chunk

        # ---- strictly serial recurrence; hidden states live in the carry ----
        def step(t, hs):
            row = pl.multiple_of(t * Bp, 8)
            inp0 = xproj[pl.ds(row, Bp), :]                      # (Bp, Hp) f32
            h0 = jnp.tanh(inp0 + jnp.dot(hs[0].astype(act_dt), w_hh0_t[...],
                                         preferred_element_type=jnp.float32))
            new_hs = [h0]
            inp = h0
            for l in range(1, num_layers):
                w_ih_t, w_hh_t, _ = layer_refs[l]
                z = (jnp.dot(inp.astype(act_dt), w_ih_t[...],
                             preferred_element_type=jnp.float32)
                     + jnp.dot(hs[l].astype(act_dt), w_hh_t[...],
                               preferred_element_type=jnp.float32)
                     + deep_bias[l - 1])
                h_l = jnp.tanh(z)
                new_hs.append(h_l)
                inp = h_l
            if needs_mask:
                valid = (base + t) < T
                new_hs = [jnp.where(valid, hn, ho)
                          for hn, ho in zip(new_hs, hs)]
            return tuple(new_hs)

        hs = lax.fori_loop(0, t_chunk, step, hs0, unroll=True)

        # Carry hidden state to the next chunk.
        for l in range(num_layers):
            h_state[l] = hs[l]

        # Final outputs (rnn_out[:, -1, :] == last layer's hidden at step T-1).
        @pl.when(c == pl.num_programs(0) - 1)
        def _():
            for l in range(num_layers):
                h_out_ref[l] = hs[l]
            out_ref[...] = (jnp.dot(hs[-1].astype(act_dt), fc_w_t[...],
                                    preferred_element_type=jnp.float32)
                            + fc_b[...])

    return kernel


def init_params(key, input_size, hidden_size, num_layers):
    """Deterministic U(-1/sqrt(H), 1/sqrt(H)) init, mirroring nn.RNN / nn.Linear."""
    k_rnn = 1.0 / math.sqrt(hidden_size)
    params = {"layers": []}
    for l in range(num_layers):
        in_dim = input_size if l == 0 else hidden_size
        key, k1, k2, k3, k4 = jax.random.split(key, 5)
        params["layers"].append({
            "w_ih": jax.random.uniform(k1, (hidden_size, in_dim),
                                       jnp.float32, -k_rnn, k_rnn),
            "w_hh": jax.random.uniform(k2, (hidden_size, hidden_size),
                                       jnp.float32, -k_rnn, k_rnn),
            "b_ih": jax.random.uniform(k3, (hidden_size,),
                                       jnp.float32, -k_rnn, k_rnn),
            "b_hh": jax.random.uniform(k4, (hidden_size,),
                                       jnp.float32, -k_rnn, k_rnn),
        })
    k_fc = 1.0 / math.sqrt(hidden_size)
    key, k1, k2 = jax.random.split(key, 3)
    params["fc_w"] = jax.random.uniform(k1, (1, hidden_size),
                                        jnp.float32, -k_fc, k_fc)
    params["fc_b"] = jax.random.uniform(k2, (1,), jnp.float32, -k_fc, k_fc)
    return params


@functools.partial(jax.jit, static_argnames=("use_bf16", "t_chunk"))
def rnn_model_forward(x, params, *, use_bf16=True, t_chunk=None):
    """Equivalent of RNNModel.forward(x) -> (output:(B,1), h_t:(L,B,H))."""
    x = x.astype(jnp.float32)                 # matches `x.to(torch.float32)`
    B, T, D = x.shape
    L = len(params["layers"])
    H = params["fc_w"].shape[1]

    Bp = _round_up(B, 8)                      # sublane-aligned batch
    Hp = _round_up(H, 128)                    # lane-aligned hidden
    OUTP = 128                                # lane-dense head output slab

    if t_chunk is None:
        t_chunk = min(T, 32)
    n_chunks = -(-T // t_chunk)
    T_pad = n_chunks * t_chunk

    w_dt = jnp.bfloat16 if use_bf16 else jnp.float32

    # Time-major, batch-padded, (T_pad*Bp, D).  D stays UNPADDED so x HBM/VMEM
    # traffic is not inflated 8x; under jit the transpose+pad+reshape fuse.
    # TODO(synk): callers that can supply x already time-major (T, B, D) would
    # skip this copy entirely.
    x_tm = jnp.transpose(x, (1, 0, 2))                            # (T, B, D)
    x_tm = jnp.pad(x_tm, ((0, T_pad - T), (0, Bp - B), (0, 0)))
    x_flat = x_tm.reshape(T_pad * Bp, D).astype(w_dt)

    inputs = [x_flat]
    for l, lp in enumerate(params["layers"]):
        in_dim = D if l == 0 else H
        in_dim_p = D if l == 0 else Hp
        inputs.append(jnp.pad(lp["w_ih"].T,
                              ((0, in_dim_p - in_dim), (0, Hp - H))).astype(w_dt))
        inputs.append(jnp.pad(lp["w_hh"].T,
                              ((0, Hp - H), (0, Hp - H))).astype(w_dt))
        inputs.append(jnp.pad((lp["b_ih"] + lp["b_hh"]).reshape(1, H),
                              ((0, 0), (0, Hp - H))))             # f32 bias
    inputs.append(jnp.pad(params["fc_w"].T,
                          ((0, Hp - H), (0, OUTP - 1))).astype(w_dt))
    inputs.append(jnp.pad(params["fc_b"].reshape(1, 1),
                          ((0, 0), (0, OUTP - 1))))               # f32

    def const_spec(arr):
        zeros = (0,) * arr.ndim
        return pl.BlockSpec(arr.shape, lambda c, z=zeros: z)      # fetched once

    in_specs = [pl.BlockSpec((t_chunk * Bp, D), lambda c: (c, 0))]
    in_specs += [const_spec(a) for a in inputs[1:]]
    out_specs = (pl.BlockSpec((Bp, OUTP), lambda c: (0, 0)),
                 pl.BlockSpec((L, Bp, Hp), lambda c: (0, 0, 0)))

    # Rough VMEM residency (with double-buffer headroom) -> explicit limit.
    est = 2 * t_chunk * Bp * 128 * jnp.dtype(w_dt).itemsize       # x chunk (lane-padded bound)
    est += 2 * sum(int(np.prod(a.shape)) * a.dtype.itemsize for a in inputs[1:])
    est += t_chunk * Bp * Hp * 4 + L * Bp * Hp * 4                # scratches
    est += 2 * (Bp * OUTP * 4 + L * Bp * Hp * 4)                  # outputs
    vmem_limit = int(min(64 << 20, max(32 << 20, 2 * est + (4 << 20))))

    out_pad, h_pad = pl.pallas_call(
        make_rnn_kernel(L, T, t_chunk, Bp, Hp, use_bf16),
        out_shape=(jax.ShapeDtypeStruct((Bp, OUTP), jnp.float32),
                   jax.ShapeDtypeStruct((L, Bp, Hp), jnp.float32)),
        grid_spec=pltpu.PrefetchScalarGridSpec(
            num_scalar_prefetch=0,
            grid=(n_chunks,),
            in_specs=in_specs,
            out_specs=out_specs,
            scratch_shapes=[pltpu.VMEM((t_chunk * Bp, Hp), jnp.float32),
                            pltpu.VMEM((L, Bp, Hp), jnp.float32)]),
        compiler_params=pltpu.CompilerParams(
            dimension_semantics=("arbitrary",),
            vmem_limit_bytes=vmem_limit),
    )(*inputs)

    # TODO(synk): for production batch sizes on v7x, add a leading core-parallel
    # grid axis (or pl.core_map) splitting Bp across the two TensorCores; at
    # Bp=8 there is nothing to split.
    return out_pad[:B, :1], h_pad[:, :B, :H]


def rnn_model_reference(x, params):
    """Pure-JAX reference for correctness checking."""
    x = x.astype(jnp.float32)
    B, T, D = x.shape
    num_layers = len(params["layers"])
    H = params["fc_w"].shape[1]
    h = [jnp.zeros((B, H), jnp.float32) for _ in range(num_layers)]
    for t in range(T):
        inp = x[:, t, :]
        for l, lp in enumerate(params["layers"]):
            z = (inp @ lp["w_ih"].T + lp["b_ih"]
                 + h[l] @ lp["w_hh"].T + lp["b_hh"])
            h[l] = jnp.tanh(z)
            inp = h[l]
    out = h[-1] @ params["fc_w"].T + params["fc_b"]
    return out, jnp.stack(h, axis=0)


if __name__ == "__main__":
    # Small shapes consistent with the module's forward:
    B, T, D, H, L = 4, 8, 16, 32, 2          # batch, seq, input, hidden, layers

    key = jax.random.PRNGKey(0)
    key, xk = jax.random.split(key)
    x = jax.random.normal(xk, (B, T, D), jnp.float32)
    params = init_params(key, input_size=D, hidden_size=H, num_layers=L)

    ref_out, ref_h = rnn_model_reference(x, params)

    # Exact-math path (f32 MXU); t_chunk=3 also exercises the time-mask path.
    out32, h32 = jax.block_until_ready(
        rnn_model_forward(x, params, use_bf16=False, t_chunk=3))
    np.testing.assert_allclose(np.asarray(out32), np.asarray(ref_out),
                               rtol=1e-4, atol=1e-4)
    np.testing.assert_allclose(np.asarray(h32), np.asarray(ref_h),
                               rtol=1e-4, atol=1e-4)

    # Fast path: bf16 MXU operands with f32 accumulation (looser tolerance —
    # bf16 weight/input rounding drifts slightly over the T-step recurrence).
    out_bf, h_bf = jax.block_until_ready(
        rnn_model_forward(x, params, use_bf16=True, t_chunk=4))
    np.testing.assert_allclose(np.asarray(out_bf), np.asarray(ref_out),
                               rtol=5e-2, atol=5e-2)
    np.testing.assert_allclose(np.asarray(h_bf), np.asarray(ref_h),
                               rtol=5e-2, atol=5e-2)

    print("KERNEL_OK")
</pallas_src>

<mosaic_0001>
module attributes {stable_mosaic.version = 11 : i64} {
  func.func @kernel(%arg0: i32, %arg1: memref<24x16xf32, #tpu.memory_space<vmem>>, %arg2: memref<16x128xf32, #tpu.memory_space<vmem>>, %arg3: memref<128x128xf32, #tpu.memory_space<vmem>>, %arg4: memref<1x128xf32, #tpu.memory_space<vmem>>, %arg5: memref<128x128xf32, #tpu.memory_space<vmem>>, %arg6: memref<128x128xf32, #tpu.memory_space<vmem>>, %arg7: memref<1x128xf32, #tpu.memory_space<vmem>>, %arg8: memref<128x128xf32, #tpu.memory_space<vmem>>, %arg9: memref<1x128xf32, #tpu.memory_space<vmem>>, %arg10: memref<8x128xf32, #tpu.memory_space<vmem>>, %arg11: memref<2x8x128xf32, #tpu.memory_space<vmem>>, %arg12: memref<24x128xf32, #tpu.memory_space<vmem>>, %arg13: memref<2x8x128xf32, #tpu.memory_space<vmem>>) attributes {dimension_semantics = [#tpu.dimension_semantics<arbitrary>], iteration_bounds = array<i64: 3>, scalar_prefetch = 0 : i64, scratch_operands = 2 : i64, tpu.core_type = #tpu.core_type<tc>, window_params = [{transform_indices = @transform_0, window_bounds = array<i64: 24, 16>}, {pipeline_mode = #tpu.pipeline_mode<synchronous>, transform_indices = @transform_1, window_bounds = array<i64: 16, 128>}, {pipeline_mode = #tpu.pipeline_mode<synchronous>, transform_indices = @transform_2, window_bounds = array<i64: 128, 128>}, {pipeline_mode = #tpu.pipeline_mode<synchronous>, transform_indices = @transform_3, window_bounds = array<i64: 1, 128>}, {pipeline_mode = #tpu.pipeline_mode<synchronous>, transform_indices = @transform_4, window_bounds = array<i64: 128, 128>}, {pipeline_mode = #tpu.pipeline_mode<synchronous>, transform_indices = @transform_5, window_bounds = array<i64: 128, 128>}, {pipeline_mode = #tpu.pipeline_mode<synchronous>, transform_indices = @transform_6, window_bounds = array<i64: 1, 128>}, {pipeline_mode = #tpu.pipeline_mode<synchronous>, transform_indices = @transform_7, window_bounds = array<i64: 128, 128>}, {pipeline_mode = #tpu.pipeline_mode<synchronous>, transform_indices = @transform_8, window_bounds = array<i64: 1, 128>}, {pipeline_mode = #tpu.pipeline_mode<synchronous>, transform_indices = @transform_9, window_bounds = array<i64: 8, 128>}, {pipeline_mode = #tpu.pipeline_mode<synchronous>, transform_indices = @transform_10, window_bounds = array<i64: 2, 8, 128>}]} {
    %c0_i32 = arith.constant 0 : i32
    %0 = arith.cmpi eq, %arg0, %c0_i32 : i32
    %1 = arith.extui %0 : i1 to i32
    %c0_i32_0 = arith.constant 0 : i32
    %2 = arith.cmpi ne, %1, %c0_i32_0 : i32
    scf.if %2 {
      %cst_60 = arith.constant 0.000000e+00 : f32
      %84 = vector.broadcast %cst_60 : f32 to vector<2x8x128xf32>
      %c0_61 = arith.constant 0 : index
      %c0_62 = arith.constant 0 : index
      %c0_63 = arith.constant 0 : index
      %85 = vector.load %arg13[%c0_61, %c0_62, %c0_63] : memref<2x8x128xf32, #tpu.memory_space<vmem>>, vector<2x8x128xf32>
      tpu.vector_store %arg13[%c0_61, %c0_62, %c0_63], %84 {strides = array<i32>} : memref<2x8x128xf32, #tpu.memory_space<vmem>>, vector<2x8x128xf32>,
    } else {
    }
    %c0 = arith.constant 0 : index
    %c0_1 = arith.constant 0 : index
    %3 = vector.load %arg1[%c0, %c0_1] : memref<24x16xf32, #tpu.memory_space<vmem>>, vector<24x16xf32>
    %c0_2 = arith.constant 0 : index
    %c0_3 = arith.constant 0 : index
    %4 = vector.load %arg2[%c0_2, %c0_3] : memref<16x128xf32, #tpu.memory_space<vmem>>, vector<16x128xf32>
    %cst = arith.constant dense<0.000000e+00> : vector<24x128xf32>
    %5 = tpu.matmul %3, %4, %cst {dimension_numbers = #tpu.dot_dimension_numbers<[1], [0], [0], [1], [0, 0, 1, 1], [], []>} : vector<24x16xf32>, vector<16x128xf32>, vector<24x128xf32> -> vector<24x128xf32>
    %c0_4 = arith.constant 0 : index
    %c0_5 = arith.constant 0 : index
    %6 = vector.load %arg4[%c0_4, %c0_5] : memref<1x128xf32, #tpu.memory_space<vmem>>, vector<1x128xf32>
    %7 = vector.broadcast %6 : vector<1x128xf32> to vector<24x128xf32>
    %8 = arith.addf %5, %7 : vector<24x128xf32>
    %c0_6 = arith.constant 0 : index
    %c0_7 = arith.constant 0 : index
    %9 = vector.load %arg12[%c0_6, %c0_7] : memref<24x128xf32, #tpu.memory_space<vmem>>, vector<24x128xf32>
    tpu.vector_store %arg12[%c0_6, %c0_7], %8 {strides = array<i32>} : memref<24x128xf32, #tpu.memory_space<vmem>>, vector<24x128xf32>,
    %c0_8 = arith.constant 0 : index
    %c0_9 = arith.constant 0 : index
    %10 = vector.load %arg7[%c0_8, %c0_9] : memref<1x128xf32, #tpu.memory_space<vmem>>, vector<1x128xf32>
    %11 = vector.shape_cast %10 : vector<1x128xf32> to vector<1x128xf32>
    %12 = vector.broadcast %11 : vector<1x128xf32> to vector<8x128xf32>
    %c0_10 = arith.constant 0 : index
    %c0_11 = arith.constant 0 : index
    %c0_12 = arith.constant 0 : index
    %13 = vector.load %arg13[%c0_10, %c0_11, %c0_12] : memref<2x8x128xf32, #tpu.memory_space<vmem>>, vector<1x8x128xf32>
    %14 = vector.shape_cast %13 : vector<1x8x128xf32> to vector<8x128xf32>
    %c1 = arith.constant 1 : index
    %c0_13 = arith.constant 0 : index
    %c0_14 = arith.constant 0 : index
    %15 = vector.load %arg13[%c1, %c0_13, %c0_14] : memref<2x8x128xf32, #tpu.memory_space<vmem>>, vector<1x8x128xf32>
    %16 = vector.shape_cast %15 : vector<1x8x128xf32> to vector<8x128xf32>
    %c3_i32 = arith.constant 3 : i32
    %17 = arith.muli %arg0, %c3_i32 : i32
    %c0_i32_15 = arith.constant 0 : i32
    %c8_i32 = arith.constant 8 : i32
    %18 = arith.muli %c0_i32_15, %c8_i32 : i32
    %19 = tpu.assume_multiple %18, 8 : i32
    %20 = arith.index_cast %19 : i32 to index
    %c0_16 = arith.constant 0 : index
    %21 = vector.load %arg12[%20, %c0_16] : memref<24x128xf32, #tpu.memory_space<vmem>>, vector<8x128xf32>
    %c0_17 = arith.constant 0 : index
    %c0_18 = arith.constant 0 : index
    %22 = vector.load %arg3[%c0_17, %c0_18] : memref<128x128xf32, #tpu.memory_space<vmem>>, vector<128x128xf32>
    %cst_19 = arith.constant dense<0.000000e+00> : vector<8x128xf32>
    %23 = tpu.matmul %14, %22, %cst_19 {dimension_numbers = #tpu.dot_dimension_numbers<[1], [0], [0], [1], [0, 0, 1, 1], [], []>} : vector<8x128xf32>, vector<128x128xf32>, vector<8x128xf32> -> vector<8x128xf32>
    %24 = arith.addf %21, %23 : vector<8x128xf32>
    %25 = math.tanh %24 : vector<8x128xf32>
    %c0_20 = arith.constant 0 : index
    %c0_21 = arith.constant 0 : index
    %26 = vector.load %arg5[%c0_20, %c0_21] : memref<128x128xf32, #tpu.memory_space<vmem>>, vector<128x128xf32>
    %cst_22 = arith.constant dense<0.000000e+00> : vector<8x128xf32>
    %27 = tpu.matmul %25, %26, %cst_22 {dimension_numbers = #tpu.dot_dimension_numbers<[1], [0], [0], [1], [0, 0, 1, 1], [], []>} : vector<8x128xf32>, vector<128x128xf32>, vector<8x128xf32> -> vector<8x128xf32>
    %c0_23 = arith.constant 0 : index
    %c0_24 = arith.constant 0 : index
    %28 = vector.load %arg6[%c0_23, %c0_24] : memref<128x128xf32, #tpu.memory_space<vmem>>, vector<128x128xf32>
    %cst_25 = arith.constant dense<0.000000e+00> : vector<8x128xf32>
    %29 = tpu.matmul %16, %28, %cst_25 {dimension_numbers = #tpu.dot_dimension_numbers<[1], [0], [0], [1], [0, 0, 1, 1], [], []>} : vector<8x128xf32>, vector<128x128xf32>, vector<8x128xf32> -> vector<8x128xf32>
    %30 = arith.addf %27, %29 : vector<8x128xf32>
    %31 = arith.addf %30, %12 : vector<8x128xf32>
    %32 = math.tanh %31 : vector<8x128xf32>
    %33 = arith.addi %17, %c0_i32_15 : i32
    %c8_i32_26 = arith.constant 8 : i32
    %34 = arith.cmpi slt, %33, %c8_i32_26 : i32
    %35 = arith.select %34, %25, %14 : vector<8x128xf32>
    %36 = arith.select %34, %32, %16 : vector<8x128xf32>
    %c1_i32 = arith.constant 1 : i32
    %c8_i32_27 = arith.constant 8 : i32
    %37 = arith.muli %c1_i32, %c8_i32_27 : i32
    %38 = tpu.assume_multiple %37, 8 : i32
    %39 = arith.index_cast %38 : i32 to index
    %c0_28 = arith.constant 0 : index
    %40 = vector.load %arg12[%39, %c0_28] : memref<24x128xf32, #tpu.memory_space<vmem>>, vector<8x128xf32>
    %c0_29 = arith.constant 0 : index
    %c0_30 = arith.constant 0 : index
    %41 = vector.load %arg3[%c0_29, %c0_30] : memref<128x128xf32, #tpu.memory_space<vmem>>, vector<128x128xf32>
    %cst_31 = arith.constant dense<0.000000e+00> : vector<8x128xf32>
    %42 = tpu.matmul %35, %41, %cst_31 {dimension_numbers = #tpu.dot_dimension_numbers<[1], [0], [0], [1], [0, 0, 1, 1], [], []>} : vector<8x128xf32>, vector<128x128xf32>, vector<8x128xf32> -> vector<8x128xf32>
    %43 = arith.addf %40, %42 : vector<8x128xf32>
    %44 = math.tanh %43 : vector<8x128xf32>
    %c0_32 = arith.constant 0 : index
    %c0_33 = arith.constant 0 : index
    %45 = vector.load %arg5[%c0_32, %c0_33] : memref<128x128xf32, #tpu.memory_space<vmem>>, vector<128x128xf32>
    %cst_34 = arith.constant dense<0.000000e+00> : vector<8x128xf32>
    %46 = tpu.matmul %44, %45, %cst_34 {dimension_numbers = #tpu.dot_dimension_numbers<[1], [0], [0], [1], [0, 0, 1, 1], [], []>} : vector<8x128xf32>, vector<128x128xf32>, vector<8x128xf32> -> vector<8x128xf32>
    %c0_35 = arith.constant 0 : index
    %c0_36 = arith.constant 0 : index
    %47 = vector.load %arg6[%c0_35, %c0_36] : memref<128x128xf32, #tpu.memory_space<vmem>>, vector<128x128xf32>
    %cst_37 = arith.constant dense<0.000000e+00> : vector<8x128xf32>
    %48 = tpu.matmul %36, %47, %cst_37 {dimension_numbers = #tpu.dot_dimension_numbers<[1], [0], [0], [1], [0, 0, 1, 1], [], []>} : vector<8x128xf32>, vector<128x128xf32>, vector<8x128xf32> -> vector<8x128xf32>
    %49 = arith.addf %46, %48 : vector<8x128xf32>
    %50 = arith.addf %49, %12 : vector<8x128xf32>
    %51 = math.tanh %50 : vector<8x128xf32>
    %52 = arith.addi %17, %c1_i32 : i32
    %c8_i32_38 = arith.constant 8 : i32
    %53 = arith.cmpi slt, %52, %c8_i32_38 : i32
    %54 = arith.select %53, %44, %35 : vector<8x128xf32>
    %55 = arith.select %53, %51, %36 : vector<8x128xf32>
    %c2_i32 = arith.constant 2 : i32
    %c8_i32_39 = arith.constant 8 : i32
    %56 = arith.muli %c2_i32, %c8_i32_39 : i32
    %57 = tpu.assume_multiple %56, 8 : i32
    %58 = arith.index_cast %57 : i32 to index
    %c0_40 = arith.constant 0 : index
    %59 = vector.load %arg12[%58, %c0_40] : memref<24x128xf32, #tpu.memory_space<vmem>>, vector<8x128xf32>
    %c0_41 = arith.constant 0 : index
    %c0_42 = arith.constant 0 : index
    %60 = vector.load %arg3[%c0_41, %c0_42] : memref<128x128xf32, #tpu.memory_space<vmem>>, vector<128x128xf32>
    %cst_43 = arith.constant dense<0.000000e+00> : vector<8x128xf32>
    %61 = tpu.matmul %54, %60, %cst_43 {dimension_numbers = #tpu.dot_dimension_numbers<[1], [0], [0], [1], [0, 0, 1, 1], [], []>} : vector<8x128xf32>, vector<128x128xf32>, vector<8x128xf32> -> vector<8x128xf32>
    %62 = arith.addf %59, %61 : vector<8x128xf32>
    %63 = math.tanh %62 : vector<8x128xf32>
    %c0_44 = arith.constant 0 : index
    %c0_45 = arith.constant 0 : index
    %64 = vector.load %arg5[%c0_44, %c0_45] : memref<128x128xf32, #tpu.memory_space<vmem>>, vector<128x128xf32>
    %cst_46 = arith.constant dense<0.000000e+00> : vector<8x128xf32>
    %65 = tpu.matmul %63, %64, %cst_46 {dimension_numbers = #tpu.dot_dimension_numbers<[1], [0], [0], [1], [0, 0, 1, 1], [], []>} : vector<8x128xf32>, vector<128x128xf32>, vector<8x128xf32> -> vector<8x128xf32>
    %c0_47 = arith.constant 0 : index
    %c0_48 = arith.constant 0 : index
    %66 = vector.load %arg6[%c0_47, %c0_48] : memref<128x128xf32, #tpu.memory_space<vmem>>, vector<128x128xf32>
    %cst_49 = arith.constant dense<0.000000e+00> : vector<8x128xf32>
    %67 = tpu.matmul %55, %66, %cst_49 {dimension_numbers = #tpu.dot_dimension_numbers<[1], [0], [0], [1], [0, 0, 1, 1], [], []>} : vector<8x128xf32>, vector<128x128xf32>, vector<8x128xf32> -> vector<8x128xf32>
    %68 = arith.addf %65, %67 : vector<8x128xf32>
    %69 = arith.addf %68, %12 : vector<8x128xf32>
    %70 = math.tanh %69 : vector<8x128xf32>
    %71 = arith.addi %17, %c2_i32 : i32
    %c8_i32_50 = arith.constant 8 : i32
    %72 = arith.cmpi slt, %71, %c8_i32_50 : i32
    %73 = arith.select %72, %63, %54 : vector<8x128xf32>
    %74 = arith.select %72, %70, %55 : vector<8x128xf32>
    %c3_i32_51 = arith.constant 3 : i32
    %c0_52 = arith.constant 0 : index
    %c0_53 = arith.constant 0 : index
    %c0_54 = arith.constant 0 : index
    %75 = vector.load %arg13[%c0_52, %c0_53, %c0_54] : memref<2x8x128xf32, #tpu.memory_space<vmem>>, vector<1x8x128xf32>
    %76 = vector.shape_cast %75 : vector<1x8x128xf32> to vector<8x128xf32>
    %77 = vector.shape_cast %73 : vector<8x128xf32> to vector<1x8x128xf32>
    tpu.vector_store %arg13[%c0_52, %c0_53, %c0_54], %77 {strides = array<i32>} : memref<2x8x128xf32, #tpu.memory_space<vmem>>, vector<1x8x128xf32>,
    %c1_55 = arith.constant 1 : index
    %c0_56 = arith.constant 0 : index
    %c0_57 = arith.constant 0 : index
    %78 = vector.load %arg13[%c1_55, %c0_56, %c0_57] : memref<2x8x128xf32, #tpu.memory_space<vmem>>, vector<1x8x128xf32>
    %79 = vector.shape_cast %78 : vector<1x8x128xf32> to vector<8x128xf32>
    %80 = vector.shape_cast %74 : vector<8x128xf32> to vector<1x8x128xf32>
    tpu.vector_store %arg13[%c1_55, %c0_56, %c0_57], %80 {strides = array<i32>} : memref<2x8x128xf32, #tpu.memory_space<vmem>>, vector<1x8x128xf32>,
    %c2_i32_58 = arith.constant 2 : i32
    %81 = arith.cmpi eq, %arg0, %c2_i32_58 : i32
    %82 = arith.extui %81 : i1 to i32
    %c0_i32_59 = arith.constant 0 : i32
    %83 = arith.cmpi ne, %82, %c0_i32_59 : i32
    scf.if %83 {
      %c0_60 = arith.constant 0 : index
      %c0_61 = arith.constant 0 : index
      %c0_62 = arith.constant 0 : index
      %84 = vector.load %arg11[%c0_60, %c0_61, %c0_62] : memref<2x8x128xf32, #tpu.memory_space<vmem>>, vector<1x8x128xf32>
      %85 = vector.shape_cast %84 : vector<1x8x128xf32> to vector<8x128xf32>
      %86 = vector.shape_cast %73 : vector<8x128xf32> to vector<1x8x128xf32>
      tpu.vector_store %arg11[%c0_60, %c0_61, %c0_62], %86 {strides = array<i32>} : memref<2x8x128xf32, #tpu.memory_space<vmem>>, vector<1x8x128xf32>,
      %c1_63 = arith.constant 1 : index
      %c0_64 = arith.constant 0 : index
      %c0_65 = arith.constant 0 : index
      %87 = vector.load %arg11[%c1_63, %c0_64, %c0_65] : memref<2x8x128xf32, #tpu.memory_space<vmem>>, vector<1x8x128xf32>
      %88 = vector.shape_cast %87 : vector<1x8x128xf32> to vector<8x128xf32>
      %89 = vector.shape_cast %74 : vector<8x128xf32> to vector<1x8x128xf32>
      tpu.vector_store %arg11[%c1_63, %c0_64, %c0_65], %89 {strides = array<i32>} : memref<2x8x128xf32, #tpu.memory_space<vmem>>, vector<1x8x128xf32>,
      %c0_66 = arith.constant 0 : index
      %c0_67 = arith.constant 0 : index
      %90 = vector.load %arg8[%c0_66, %c0_67] : memref<128x128xf32, #tpu.memory_space<vmem>>, vector<128x128xf32>
      %cst_68 = arith.constant dense<0.000000e+00> : vector<8x128xf32>
      %91 = tpu.matmul %74, %90, %cst_68 {dimension_numbers = #tpu.dot_dimension_numbers<[1], [0], [0], [1], [0, 0, 1, 1], [], []>} : vector<8x128xf32>, vector<128x128xf32>, vector<8x128xf32> -> vector<8x128xf32>
      %c0_69 = arith.constant 0 : index
      %c0_70 = arith.constant 0 : index
      %92 = vector.load %arg9[%c0_69, %c0_70] : memref<1x128xf32, #tpu.memory_space<vmem>>, vector<1x128xf32>
      %93 = vector.broadcast %92 : vector<1x128xf32> to vector<8x128xf32>
      %94 = arith.addf %91, %93 : vector<8x128xf32>
      %c0_71 = arith.constant 0 : index
      %c0_72 = arith.constant 0 : index
      %95 = vector.load %arg10[%c0_71, %c0_72] : memref<8x128xf32, #tpu.memory_space<vmem>>, vector<8x128xf32>
      tpu.vector_store %arg10[%c0_71, %c0_72], %94 {strides = array<i32>} : memref<8x128xf32, #tpu.memory_space<vmem>>, vector<8x128xf32>,
    } else {
    }
    return
  }
  func.func @transform_0(%arg0: i32) -> (i32, i32) {
    %c0_i32 = arith.constant 0 : i32
    %c0_i32_0 = arith.constant 0 : i32
    return %arg0, %c0_i32 : i32, i32
  }
  func.func @transform_1(%arg0: i32) -> (i32, i32) {
    %c0_i32 = arith.constant 0 : i32
    %c0_i32_0 = arith.constant 0 : i32
    %c0_i32_1 = arith.constant 0 : i32
    return %c0_i32, %c0_i32_0 : i32, i32
  }
  func.func @transform_2(%arg0: i32) -> (i32, i32) {
    %c0_i32 = arith.constant 0 : i32
    %c0_i32_0 = arith.constant 0 : i32
    %c0_i32_1 = arith.constant 0 : i32
    return %c0_i32, %c0_i32_0 : i32, i32
  }
  func.func @transform_3(%arg0: i32) -> (i32, i32) {
    %c0_i32 = arith.constant 0 : i32
    %c0_i32_0 = arith.constant 0 : i32
    %c0_i32_1 = arith.constant 0 : i32
    return %c0_i32, %c0_i32_0 : i32, i32
  }
  func.func @transform_4(%arg0: i32) -> (i32, i32) {
    %c0_i32 = arith.constant 0 : i32
    %c0_i32_0 = arith.constant 0 : i32
    %c0_i32_1 = arith.constant 0 : i32
    return %c0_i32, %c0_i32_0 : i32, i32
  }
  func.func @transform_5(%arg0: i32) -> (i32, i32) {
    %c0_i32 = arith.constant 0 : i32
    %c0_i32_0 = arith.constant 0 : i32
    %c0_i32_1 = arith.constant 0 : i32
    return %c0_i32, %c0_i32_0 : i32, i32
  }
  func.func @transform_6(%arg0: i32) -> (i32, i32) {
    %c0_i32 = arith.constant 0 : i32
    %c0_i32_0 = arith.constant 0 : i32
    %c0_i32_1 = arith.constant 0 : i32
    return %c0_i32, %c0_i32_0 : i32, i32
  }
  func.func @transform_7(%arg0: i32) -> (i32, i32) {
    %c0_i32 = arith.constant 0 : i32
    %c0_i32_0 = arith.constant 0 : i32
    %c0_i32_1 = arith.constant 0 : i32
    return %c0_i32, %c0_i32_0 : i32, i32
  }
  func.func @transform_8(%arg0: i32) -> (i32, i32) {
    %c0_i32 = arith.constant 0 : i32
    %c0_i32_0 = arith.constant 0 : i32
    %c0_i32_1 = arith.constant 0 : i32
    return %c0_i32, %c0_i32_0 : i32, i32
  }
  func.func @transform_9(%arg0: i32) -> (i32, i32) {
    %c0_i32 = arith.constant 0 : i32
    %c0_i32_0 = arith.constant 0 : i32
    %c0_i32_1 = arith.constant 0 : i32
    return %c0_i32, %c0_i32_0 : i32, i32
  }
  func.func @transform_10(%arg0: i32) -> (i32, i32, i32) {
    %c0_i32 = arith.constant 0 : i32
    %c0_i32_0 = arith.constant 0 : i32
    %c0_i32_1 = arith.constant 0 : i32
    %c0_i32_2 = arith.constant 0 : i32
    return %c0_i32, %c0_i32_0, %c0_i32_1 : i32, i32, i32
  }
}

</mosaic_0001>

<llo_original>
// kernel: rnn_model_forward.1
$region0: #{rnn_model_forward.1}
  #allocation0 [shape = 'u32[]', space=smem, size = 0x4, offset = 0x4, fixed_abs, tag = 'smem constant byte address 0x4 - core index']
  #allocation1 [shape = 'u32[144,128]{1,0:T(1,128)}', space=vmem, size = 0x12000, scoped, tag = 'internal scratch']
  #allocation2 [shape = 'f32[24,128]{1,0:T(8,128)}', space=vmem, size = 0x3000, scoped, tag = 'scratch operand']
  #allocation3 [shape = 'f32[2,8,128]{2,1,0:T(8,128)}', space=vmem, size = 0x2000, scoped, tag = 'scratch operand']
  %s0 = inlined_call_operand.vmem [shape: f32[72,16], index: 0, kind: input, shape index: {}]
  %s1 = inlined_call_operand.vmem [shape: f32[16,128], index: 1, kind: input, shape index: {}]
  %s2 = inlined_call_operand.vmem [shape: f32[128,128], index: 2, kind: input, shape index: {}]
  %s3 = inlined_call_operand.vmem [shape: f32[1,128], index: 3, kind: input, shape index: {}]
  %s4 = inlined_call_operand.vmem [shape: f32[128,128], index: 4, kind: input, shape index: {}]
  %s5 = inlined_call_operand.vmem [shape: f32[128,128], index: 5, kind: input, shape index: {}]
  %s6 = inlined_call_operand.vmem [shape: f32[1,128], index: 6, kind: input, shape index: {}]
  %s7 = inlined_call_operand.vmem [shape: f32[128,128], index: 7, kind: input, shape index: {}]
  %s8 = inlined_call_operand.vmem [shape: f32[1,128], index: 8, kind: input, shape index: {}]
  %s9 = inlined_call_operand.vmem [shape: f32[8,128], index: 9, kind: output, shape index: {0}]
  %s10 = inlined_call_operand.vmem [shape: f32[2,8,128], index: 10, kind: output, shape index: {1}]
  %11 = xla_tuple %s9, %s10
  %s12 = sld [smem:[#allocation0]]
  $region85: #{rnn_model_forward.1} parent=0
    _
  %s14 = ssub.s32 1, %s12
  %s15 = scalar_select 0, %s14, %s12
  loop: start=0, step=1, limit=5
  $region2: #{rnn_model_forward.1} parent=0 // loop_pre_header
    _
  $region3: #{rnn_model_forward.1} parent=0 // loop_header
    %s17 = sphi 0, %s21
    %p18 = scmp.ge.s32.totalorder %s17, 5
    %s27 = sphi 0, %s29
    %s30 = sphi 0, %s27
    %s31 = sphi 0, %s30
    %s47 = sphi 0, %s31
    %s51 = sphi 0, %s51
    %s53 = sphi 0, %s51
    %s54 = sphi 0, %s53
    %s68 = sphi 0, %s54
    %s72 = sphi 0, %s72
    %s74 = sphi 0, %s72
    %s75 = sphi 0, %s74
    %s89 = sphi 0, %s75
    %s93 = sphi 0, %s93
    %s95 = sphi 0, %s93
    %s96 = sphi 0, %s95
    %s110 = sphi 0, %s96
    %s114 = sphi 0, %s114
    %s116 = sphi 0, %s114
    %s117 = sphi 0, %s116
    %s131 = sphi 0, %s117
    %s135 = sphi 0, %s135
    %s137 = sphi 0, %s135
    %s138 = sphi 0, %s137
    %s152 = sphi 0, %s138
    %s156 = sphi 0, %s156
    %s158 = sphi 0, %s156
    %s159 = sphi 0, %s158
    %s173 = sphi 0, %s159
    %s177 = sphi 0, %s177
    %s179 = sphi 0, %s177
    %s180 = sphi 0, %s179
    %s194 = sphi 0, %s180
    %s198 = sphi 0, %s198
    %s200 = sphi 0, %s198
    %s201 = sphi 0, %s200
    %s215 = sphi 0, %s201
    %s219 = sphi 0, %s219
    %s221 = sphi 0, %s219
    %s222 = sphi 0, %s221
    %s236 = sphi 0, %s222
    %s240 = sphi 0, %s240
    %s242 = sphi 0, %s240
    %s243 = sphi 0, %s242
    %s257 = sphi 0, %s243
  $region4: #{rnn_model_forward.1} parent=0 // loop_header_branch
    %20 = sbr.rel (%p18) target = $region8
  $region5: #{rnn_model_forward.1} parent=0 // loop_body
    %s22 = ssub.s32 %s17, 1
    %s23 = ssub.s32 %s17, 2
    %s24 = sadd.s32 %s17, 1
    %s25 = ssub.s32 %s17, %s24
    %p26 = scmp.eq.s32.totalorder %s25, 0
    %s28 = sadd.s32 %s27, 1
    %s29 = scalar_select %p26, %s27, %s28
    %p32 = pneg %p26
    %p33 = scmp.eq.s32.totalorder %s17, 2
    %p34 = por %p32, %p33
    %p35 = scmp.ne.s32.totalorder %s27, %s30
    %p36 = scmp.eq.s32.totalorder %s17, 0
    %p37 = por %p35, %p36
    %p38 = scmp.ne.s32.totalorder %s27, %s30
    %p39 = scmp.eq.s32.totalorder %s22, 2
    %p40 = por %p38, %p39
    %p41 = scmp.ne.s32.totalorder %s30, %s31
    %p42 = scmp.eq.s32.totalorder %s22, 0
    %p43 = por %p41, %p42
    %p44 = scmp.ne.s32.totalorder %s30, %s31
    %p45 = scmp.eq.s32.totalorder %s23, 2
    %p46 = por %p44, %p45
    %p48 = scmp.ne.s32.totalorder %s31, %s47
    %p49 = scmp.eq.s32.totalorder %s23, 0
    %p50 = por %p48, %p49
    %s52 = sadd.s32 %s51, 1
    %p55 = scmp.eq.s32.totalorder %s17, 2
    %p56 = scmp.ne.s32.totalorder %s51, %s53
    %p57 = scmp.eq.s32.totalorder %s17, 0
    %p58 = por %p56, %p57
    %p59 = scmp.ne.s32.totalorder %s51, %s53
    %p60 = scmp.eq.s32.totalorder %s22, 2
    %p61 = por %p59, %p60
    %p62 = scmp.ne.s32.totalorder %s53, %s54
    %p63 = scmp.eq.s32.totalorder %s22, 0
    %p64 = por %p62, %p63
    %p65 = scmp.ne.s32.totalorder %s53, %s54
    %p66 = scmp.eq.s32.totalorder %s23, 2
    %p67 = por %p65, %p66
    %p69 = scmp.ne.s32.totalorder %s54, %s68
    %p70 = scmp.eq.s32.totalorder %s23, 0
    %p71 = por %p69, %p70
    %s73 = sadd.s32 %s72, 1
    %p76 = scmp.eq.s32.totalorder %s17, 2
    %p77 = scmp.ne.s32.totalorder %s72, %s74
    %p78 = scmp.eq.s32.totalorder %s17, 0
    %p79 = por %p77, %p78
    %p80 = scmp.ne.s32.totalorder %s72, %s74
    %p81 = scmp.eq.s32.totalorder %s22, 2
    %p82 = por %p80, %p81
    %p83 = scmp.ne.s32.totalorder %s74, %s75
    %p84 = scmp.eq.s32.totalorder %s22, 0
    %p85 = por %p83, %p84
    %p86 = scmp.ne.s32.totalorder %s74, %s75
    %p87 = scmp.eq.s32.totalorder %s23, 2
    %p88 = por %p86, %p87
    %p90 = scmp.ne.s32.totalorder %s75, %s89
    %p91 = scmp.eq.s32.totalorder %s23, 0
    %p92 = por %p90, %p91
    %s94 = sadd.s32 %s93, 1
    %p97 = scmp.eq.s32.totalorder %s17, 2
    %p98 = scmp.ne.s32.totalorder %s93, %s95
    %p99 = scmp.eq.s32.totalorder %s17, 0
    %p100 = por %p98, %p99
    %p101 = scmp.ne.s32.totalorder %s93, %s95
    %p102 = scmp.eq.s32.totalorder %s22, 2
    %p103 = por %p101, %p102
    %p104 = scmp.ne.s32.totalorder %s95, %s96
    %p105 = scmp.eq.s32.totalorder %s22, 0
    %p106 = por %p104, %p105
    %p107 = scmp.ne.s32.totalorder %s95, %s96
    %p108 = scmp.eq.s32.totalorder %s23, 2
    %p109 = por %p107, %p108
    %p111 = scmp.ne.s32.totalorder %s96, %s110
    %p112 = scmp.eq.s32.totalorder %s23, 0
    %p113 = por %p111, %p112
    %s115 = sadd.s32 %s114, 1
    %p118 = scmp.eq.s32.totalorder %s17, 2
    %p119 = scmp.ne.s32.totalorder %s114, %s116
    %p120 = scmp.eq.s32.totalorder %s17, 0
    %p121 = por %p119, %p120
    %p122 = scmp.ne.s32.totalorder %s114, %s116
    %p123 = scmp.eq.s32.totalorder %s22, 2
    %p124 = por %p122, %p123
    %p125 = scmp.ne.s32.totalorder %s116, %s117
    %p126 = scmp.eq.s32.totalorder %s22, 0
    %p127 = por %p125, %p126
    %p128 = scmp.ne.s32.totalorder %s116, %s117
    %p129 = scmp.eq.s32.totalorder %s23, 2
    %p130 = por %p128, %p129
    %p132 = scmp.ne.s32.totalorder %s117, %s131
    %p133 = scmp.eq.s32.totalorder %s23, 0
    %p134 = por %p132, %p133
    %s136 = sadd.s32 %s135, 1
    %p139 = scmp.eq.s32.totalorder %s17, 2
    %p140 = scmp.ne.s32.totalorder %s135, %s137
    %p141 = scmp.eq.s32.totalorder %s17, 0
    %p142 = por %p140, %p141
    %p143 = scmp.ne.s32.totalorder %s135, %s137
    %p144 = scmp.eq.s32.totalorder %s22, 2
    %p145 = por %p143, %p144
    %p146 = scmp.ne.s32.totalorder %s137, %s138
    %p147 = scmp.eq.s32.totalorder %s22, 0
    %p148 = por %p146, %p147
    %p149 = scmp.ne.s32.totalorder %s137, %s138
    %p150 = scmp.eq.s32.totalorder %s23, 2
    %p151 = por %p149, %p150
    %p153 = scmp.ne.s32.totalorder %s138, %s152
    %p154 = scmp.eq.s32.totalorder %s23, 0
    %p155 = por %p153, %p154
    %s157 = sadd.s32 %s156, 1
    %p160 = scmp.eq.s32.totalorder %s17, 2
    %p161 = scmp.ne.s32.totalorder %s156, %s158
    %p162 = scmp.eq.s32.totalorder %s17, 0
    %p163 = por %p161, %p162
    %p164 = scmp.ne.s32.totalorder %s156, %s158
    %p165 = scmp.eq.s32.totalorder %s22, 2
    %p166 = por %p164, %p165
    %p167 = scmp.ne.s32.totalorder %s158, %s159
    %p168 = scmp.eq.s32.totalorder %s22, 0
    %p169 = por %p167, %p168
    %p170 = scmp.ne.s32.totalorder %s158, %s159
    %p171 = scmp.eq.s32.totalorder %s23, 2
    %p172 = por %p170, %p171
    %p174 = scmp.ne.s32.totalorder %s159, %s173
    %p175 = scmp.eq.s32.totalorder %s23, 0
    %p176 = por %p174, %p175
    %s178 = sadd.s32 %s177, 1
    %p181 = scmp.eq.s32.totalorder %s17, 2
    %p182 = scmp.ne.s32.totalorder %s177, %s179
    %p183 = scmp.eq.s32.totalorder %s17, 0
    %p184 = por %p182, %p183
    %p185 = scmp.ne.s32.totalorder %s177, %s179
    %p186 = scmp.eq.s32.totalorder %s22, 2
    %p187 = por %p185, %p186
    %p188 = scmp.ne.s32.totalorder %s179, %s180
    %p189 = scmp.eq.s32.totalorder %s22, 0
    %p190 = por %p188, %p189
    %p191 = scmp.ne.s32.totalorder %s179, %s180
    %p192 = scmp.eq.s32.totalorder %s23, 2
    %p193 = por %p191, %p192
    %p195 = scmp.ne.s32.totalorder %s180, %s194
    %p196 = scmp.eq.s32.totalorder %s23, 0
    %p197 = por %p195, %p196
    %s199 = sadd.s32 %s198, 1
    %p202 = scmp.eq.s32.totalorder %s17, 2
    %p203 = scmp.ne.s32.totalorder %s198, %s200
    %p204 = scmp.eq.s32.totalorder %s17, 0
    %p205 = por %p203, %p204
    %p206 = scmp.ne.s32.totalorder %s198, %s200
    %p207 = scmp.eq.s32.totalorder %s22, 2
    %p208 = por %p206, %p207
    %p209 = scmp.ne.s32.totalorder %s200, %s201
    %p210 = scmp.eq.s32.totalorder %s22, 0
    %p211 = por %p209, %p210
    %p212 = scmp.ne.s32.totalorder %s200, %s201
    %p213 = scmp.eq.s32.totalorder %s23, 2
    %p214 = por %p212, %p213
    %p216 = scmp.ne.s32.totalorder %s201, %s215
    %p217 = scmp.eq.s32.totalorder %s23, 0
    %p218 = por %p216, %p217
    %s220 = sadd.s32 %s219, 1
    %p223 = scmp.eq.s32.totalorder %s17, 2
    %p224 = scmp.ne.s32.totalorder %s219, %s221
    %p225 = scmp.eq.s32.totalorder %s17, 0
    %p226 = por %p224, %p225
    %p227 = scmp.ne.s32.totalorder %s219, %s221
    %p228 = scmp.eq.s32.totalorder %s22, 2
    %p229 = por %p227, %p228
    %p230 = scmp.ne.s32.totalorder %s221, %s222
    %p231 = scmp.eq.s32.totalorder %s22, 0
    %p232 = por %p230, %p231
    %p233 = scmp.ne.s32.totalorder %s221, %s222
    %p234 = scmp.eq.s32.totalorder %s23, 2
    %p235 = por %p233, %p234
    %p237 = scmp.ne.s32.totalorder %s222, %s236
    %p238 = scmp.eq.s32.totalorder %s23, 0
    %p239 = por %p237, %p238
    %s241 = sadd.s32 %s240, 1
    %p244 = scmp.eq.s32.totalorder %s17, 2
    %p245 = scmp.ne.s32.totalorder %s240, %s242
    %p246 = scmp.eq.s32.totalorder %s17, 0
    %p247 = por %p245, %p246
    %p248 = scmp.ne.s32.totalorder %s240, %s242
    %p249 = scmp.eq.s32.totalorder %s22, 2
    %p250 = por %p248, %p249
    %p251 = scmp.ne.s32.totalorder %s242, %s243
    %p252 = scmp.eq.s32.totalorder %s22, 0
    %p253 = por %p251, %p252
    %p254 = scmp.ne.s32.totalorder %s242, %s243
    %p255 = scmp.eq.s32.totalorder %s23, 2
    %p256 = por %p254, %p255
    %p258 = scmp.ne.s32.totalorder %s243, %s257
    %p259 = scmp.eq.s32.totalorder %s23, 0
    %p260 = por %p258, %p259
    %p261 = scmp.le.s32.totalorder 1, %s17
    %p262 = scmp.lt.s32.totalorder %s17, 4
    %p263 = pnand %p261, %p262
    %p264 = pneg %p263
    // Predicated region
    $region9: #{rnn_model_forward.1} parent=5 // pred_check
      _
    $region10: #{rnn_model_forward.1} parent=5 // pred_check_branch
      %266 = sbr.rel (%p263) target = $region12
    $region11: #{rnn_model_forward.1} parent=5 // pred_region
      %s267 = ssub.s32 %s17, 1
      // Predicated region
      $region13: #{rnn_model_forward.1} parent=11 // pred_check
        %p268 = pneg %p64
      $region14: #{rnn_model_forward.1} parent=11 // pred_check_branch
        %270 = sbr.rel (%p268) target = $region16
      $region15: #{rnn_model_forward.1} parent=11 // pred_region
        _
      $region16: #{rnn_model_forward.1} parent=11 // pred_fallthru
        _
      // Predicated region
      $region17: #{rnn_model_forward.1} parent=11 // pred_check
        %p271 = pneg %p85
      $region18: #{rnn_model_forward.1} parent=11 // pred_check_branch
        %273 = sbr.rel (%p271) target = $region20
      $region19: #{rnn_model_forward.1} parent=11 // pred_region
        _
      $region20: #{rnn_model_forward.1} parent=11 // pred_fallthru
        _
      // Predicated region
      $region21: #{rnn_model_forward.1} parent=11 // pred_check
        %p274 = pneg %p106
      $region22: #{rnn_model_forward.1} parent=11 // pred_check_branch
        %276 = sbr.rel (%p274) target = $region24
      $region23: #{rnn_model_forward.1} parent=11 // pred_region
        _
      $region24: #{rnn_model_forward.1} parent=11 // pred_fallthru
        _
      // Predicated region
      $region25: #{rnn_model_forward.1} parent=11 // pred_check
        %p277 = pneg %p127
      $region26: #{rnn_model_forward.1} parent=11 // pred_check_branch
        %279 = sbr.rel (%p277) target = $region28
      $region27: #{rnn_model_forward.1} parent=11 // pred_region
        _
      $region28: #{rnn_model_forward.1} parent=11 // pred_fallthru
        _
      // Predicated region
      $region29: #{rnn_model_forward.1} parent=11 // pred_check
        %p280 = pneg %p148
      $region30: #{rnn_model_forward.1} parent=11 // pred_check_branch
        %282 = sbr.rel (%p280) target = $region32
      $region31: #{rnn_model_forward.1} parent=11 // pred_region
        _
      $region32: #{rnn_model_forward.1} parent=11 // pred_fallthru
        _
      // Predicated region
      $region33: #{rnn_model_forward.1} parent=11 // pred_check
        %p283 = pneg %p169
      $region34: #{rnn_model_forward.1} parent=11 // pred_check_branch
        %285 = sbr.rel (%p283) target = $region36
      $region35: #{rnn_model_forward.1} parent=11 // pred_region
        _
      $region36: #{rnn_model_forward.1} parent=11 // pred_fallthru
        _
      // Predicated region
      $region37: #{rnn_model_forward.1} parent=11 // pred_check
        %p286 = pneg %p190
      $region38: #{rnn_model_forward.1} parent=11 // pred_check_branch
        %288 = sbr.rel (%p286) target = $region40
      $region39: #{rnn_model_forward.1} parent=11 // pred_region
        _
      $region40: #{rnn_model_forward.1} parent=11 // pred_fallthru
        _
      // Predicated region
      $region41: #{rnn_model_forward.1} parent=11 // pred_check
        %p289 = pneg %p211
      $region42: #{rnn_model_forward.1} parent=11 // pred_check_branch
        %291 = sbr.rel (%p289) target = $region44
      $region43: #{rnn_model_forward.1} parent=11 // pred_region
        _
      $region44: #{rnn_model_forward.1} parent=11 // pred_fallthru
        _
    $region12: #{rnn_model_forward.1} parent=5 // pred_fallthru
      _
    %p292 = scmp.lt.s32.totalorder %s17, 3
    // Predicated region
    $region45: #{rnn_model_forward.1} parent=5 // pred_check
      %p293 = pneg %p292
    $region46: #{rnn_model_forward.1} parent=5 // pred_check_branch
      %295 = sbr.rel (%p293) target = $region48
    $region47: #{rnn_model_forward.1} parent=5 // pred_region
      // Predicated region
      $region49: #{rnn_model_forward.1} parent=47 // pred_check
        %p296 = pneg %p37
      $region50: #{rnn_model_forward.1} parent=47 // pred_check_branch
        %298 = sbr.rel (%p296) target = $region52
      $region51: #{rnn_model_forward.1} parent=47 // pred_region
        %s299 = smul.u32 3, %s17
        %p300 = scmp.lt.s32.totalorder %s299, 8
        %s301 = scalar_select %p300, %s299, 8
        %s302 = smul.addr %s301, 8
        %s303 = scalar_lea.vmem %s0, %s302
        %s304 = smul.u32 3, %s17
      $region52: #{rnn_model_forward.1} parent=47 // pred_fallthru
        _
    $region48: #{rnn_model_forward.1} parent=5 // pred_fallthru
      _
    %p305 = scmp.le.s32.totalorder 1, %s17
    %p306 = scmp.lt.s32.totalorder %s17, 4
    %p307 = pnand %p305, %p306
    %p308 = pneg %p307
    // Predicated region
    $region53: #{rnn_model_forward.1} parent=5 // pred_check
      _
    $region54: #{rnn_model_forward.1} parent=5 // pred_check_branch
      %310 = sbr.rel (%p307) target = $region56
    $region55: #{rnn_model_forward.1} parent=5 // pred_region
      %s311 = ssub.s32 %s17, 1
      %s312 = smul.u32 3, %s22
      %p313 = scmp.lt.s32.totalorder %s312, 8
      %s314 = scalar_select %p313, %s312, 8
      %s315 = smul.addr %s314, 8
      %s316 = scalar_lea.vmem %s0, %s315
      %p317 = pneg %p43
      %p318 = pneg %p40
      %p319 = pneg %p64
      %p320 = pneg %p61
      %p321 = pneg %p85
      %p322 = pneg %p82
      %p323 = pneg %p106
      %p324 = pneg %p103
      %p325 = pneg %p127
      %p326 = pneg %p124
      %p327 = pneg %p148
      %p328 = pneg %p145
      %p329 = pneg %p169
      %p330 = pneg %p166
      %p331 = pneg %p190
      %p332 = pneg %p187
      %p333 = pneg %p211
      %p334 = pneg %p208
      %p335 = pneg %p232
      %p336 = pneg %p229
      %p337 = pneg %p253
      %p338 = pneg %p250
      %s339 = smul.u32 3, %s22
      %p340 = scmp.lt.s32.totalorder %s339, 8
      %s341 = scalar_select %p340, %s339, 8
      %s342 = smul.addr %s341, 8
      %s343 = scalar_lea.vmem %s0, %s342
      %s344 = smul.u32 3, %s22
      %p345 = scmp.eq.s32.totalorder %s22, 0
      // Predicated region
      $region57: #{rnn_model_forward.1} parent=55 // pred_check
        %p346 = pneg %p345
      $region58: #{rnn_model_forward.1} parent=55 // pred_check_branch
        %348 = sbr.rel (%p346) target = $region60
      $region59: #{rnn_model_forward.1} parent=55 // pred_region
        %349 = vst [vmem:[#allocation3] sm:$0xff] 0.0
        %350 = vst [vmem:[#allocation3 + $0x8] sm:$0xff] 0.0
      $region60: #{rnn_model_forward.1} parent=55 // pred_fallthru
        _
      %v351 = vld [vmem:[%s343] sm:$0xff]
      %v352 = vld [vmem:[%s343 + $0x8] sm:$0xff]
      %v353 = vld [vmem:[%s343 + $0x10] sm:$0xff]
      %v354 = vld [vmem:[%s1] sm:$0xff]
      %v355 = vld [vmem:[%s1 + $0x8] sm:$0xff]
      %v356 = vld [vmem:[%s3] sm:$0x1]
      %v358 = vlaneseq
      %v359 = vshrl.u32 %v358, 7
      %v360 = vsub.s32 0, %v359
      %v361 = vrot.slane %v356, %v360
      %vm363 = vcmask 130048
      %v365 = vsel %vm363, %v351, 0
      %v368 = vsel %vm363, %v352, 0
      %v371 = vsel %vm363, %v353, 0
      %373 = vmatprep.subr.mxu0 0.0
      %374 = vmatpush1.msra.mxu0 0.0
      %375 = vmatprep.subr.mxu0 0.0
      %376 = vmatpush1.msra.mxu0 0.0
      %377 = vmatprep.subr.mxu0 0.0
      %378 = vmatpush1.msra.mxu0 0.0
      %379 = vmatprep.subr.mxu0 0.0
      %380 = vmatpush1.msra.mxu0 0.0
      %381 = vmatprep.subr.mxu0 0.0
      %382 = vmatpush1.msra.mxu0 0.0
      %383 = vmatprep.subr.mxu0 0.0
      %384 = vmatpush1.msra.mxu0 0.0
      %385 = vmatprep.subr.mxu0 0.0
      %386 = vmatpush1.msra.mxu0 0.0
      %387 = vmatprep.subr.mxu0 0.0
      %388 = vmatpush1.msra.mxu0 0.0
      %389 = vmatprep.subr.mxu0 0.0
      %390 = vmatpush1.msra.mxu0 0.0
      %391 = vmatprep.subr.mxu0 0.0
      %392 = vmatpush1.msra.mxu0 0.0
      %393 = vmatprep.subr.mxu0 0.0
      %394 = vmatpush1.msra.mxu0 0.0
      %395 = vmatprep.subr.mxu0 0.0
      %396 = vmatpush1.msra.mxu0 0.0
      %397 = vmatprep.subr.mxu0 0.0
      %398 = vmatpush1.msra.mxu0 0.0
      %399 = vmatprep.subr.mxu0 0.0
      %400 = vmatpush1.msra.mxu0 0.0
      %401 = vmatprep.subr.mxu0 0.0
      %402 = vmatpush1.msra.mxu0 %v355
      %403 = vmatprep.subr.mxu0 0.0
      %404 = vmatpush1.msra.mxu0 %v354
      %405 = vmatprep.subr.mxu0 0.0
      %406 = vmatpush2.msra.mxu0 0.0
      %407 = vmatprep.subr.mxu0 0.0
      %408 = vmatpush2.msra.mxu0 0.0
      %409 = vmatprep.subr.mxu0 0.0
      %410 = vmatpush2.msra.mxu0 0.0
      %411 = vmatprep.subr.mxu0 0.0
      %412 = vmatpush2.msra.mxu0 0.0
      %413 = vmatprep.subr.mxu0 0.0
      %414 = vmatpush2.msra.mxu0 0.0
      %415 = vmatprep.subr.mxu0 0.0
      %416 = vmatpush2.msra.mxu0 0.0
      %417 = vmatprep.subr.mxu0 0.0
      %418 = vmatpush2.msra.mxu0 0.0
      %419 = vmatprep.subr.mxu0 0.0
      %420 = vmatpush2.msra.mxu0 0.0
      %421 = vmatprep.subr.mxu0 0.0
      %422 = vmatpush2.msra.mxu0 0.0
      %423 = vmatprep.subr.mxu0 0.0
      %424 = vmatpush2.msra.mxu0 0.0
      %425 = vmatprep.subr.mxu0 0.0
      %426 = vmatpush2.msra.mxu0 0.0
      %427 = vmatprep.subr.mxu0 0.0
      %428 = vmatpush2.msra.mxu0 0.0
      %429 = vmatprep.subr.mxu0 0.0
      %430 = vmatpush2.msra.mxu0 0.0
      %431 = vmatprep.subr.mxu0 0.0
      %432 = vmatpush2.msra.mxu0 0.0
      %433 = vmatprep.subr.mxu0 0.0
      %434 = vmatpush2.msra.mxu0 0.0
      %435 = vmatprep.subr.mxu0 0.0
      %436 = vmatpush2.msra.mxu0 0.0
      %437 = vmatprep.mubr.f32.mxu0 0.0
      %438 = vmatmul.mubr.f32.gmra.mxu0 %v365
      %v439 = vpop.f32.mrf.mxu0
      %v440 = vadd.f32 %v361, %v439
      %v441 = vpop.f32.mrf.mxu0
      %442 = vmatprep.mubr.f32.mxu0 0.0
      %443 = vmatmul.mubr.f32.gmra.mxu0 %v368
      %v444 = vpop.f32.mrf.mxu0
      %v445 = vadd.f32 %v361, %v444
      %v446 = vpop.f32.mrf.mxu0
      %447 = vmatprep.mubr.f32.mxu0 0.0
      %448 = vmatmul.mubr.f32.gmra.mxu0 %v371
      %v449 = vpop.f32.mrf.mxu0
      %v450 = vadd.f32 %v361, %v449
      %v451 = vpop.f32.mrf.mxu0
      %452 = vdwg.mxu0
      %453 = vst [vmem:[#allocation2] sm:$0xff] %v440
      %454 = vst [vmem:[#allocation2 + $0x8] sm:$0xff] %v445
      %455 = vst [vmem:[#allocation2 + $0x10] sm:$0xff] %v450
      %v456 = vld [vmem:[%s6] sm:$0x1]
      %v458 = vlaneseq
      %v459 = vshrl.u32 %v458, 7
      %v460 = vsub.s32 0, %v459
      %v461 = vrot.slane %v456, %v460
      %v463 = vld [vmem:[#allocation3] sm:$0xff]
      %s464 = scalar_lea.vmem [#allocation3], 8
      %v465 = vld [vmem:[%s464] sm:$0xff]
      %s466 = smul.u32 %s22, 3
      %v467 = vld [vmem:[#allocation2] sm:$0xff]
      %v468 = vld [vmem:[%s2] sm:$0xff]
      %v469 = vld [vmem:[%s2 + $0x8] sm:$0xff]
      %v470 = vld [vmem:[%s2 + $0x10] sm:$0xff]
      %v471 = vld [vmem:[%s2 + $0x18] sm:$0xff]
      %v472 = vld [vmem:[%s2 + $0x20] sm:$0xff]
      %v473 = vld [vmem:[%s2 + $0x28] sm:$0xff]
      %v474 = vld [vmem:[%s2 + $0x30] sm:$0xff]
      %v475 = vld [vmem:[%s2 + $0x38] sm:$0xff]
      %v476 = vld [vmem:[%s2 + $0x40] sm:$0xff]
      %v477 = vld [vmem:[%s2 + $0x48] sm:$0xff]
      %v478 = vld [vmem:[%s2 + $0x50] sm:$0xff]
      %v479 = vld [vmem:[%s2 + $0x58] sm:$0xff]
      %v480 = vld [vmem:[%s2 + $0x60] sm:$0xff]
      %v481 = vld [vmem:[%s2 + $0x68] sm:$0xff]
      %v482 = vld [vmem:[%s2 + $0x70] sm:$0xff]
      %v483 = vld [vmem:[%s2 + $0x78] sm:$0xff]
      %484 = vmatprep.subr.mxu0 0.0
      %485 = vmatpush1.msra.mxu0 %v483
      %486 = vmatprep.subr.mxu0 0.0
      %487 = vmatpush1.msra.mxu0 %v482
      %488 = vmatprep.subr.mxu0 0.0
      %489 = vmatpush1.msra.mxu0 %v481
      %490 = vmatprep.subr.mxu0 0.0
      %491 = vmatpush1.msra.mxu0 %v480
      %492 = vmatprep.subr.mxu0 0.0
      %493 = vmatpush1.msra.mxu0 %v479
      %494 = vmatprep.subr.mxu0 0.0
      %495 = vmatpush1.msra.mxu0 %v478
      %496 = vmatprep.subr.mxu0 0.0
      %497 = vmatpush1.msra.mxu0 %v477
      %498 = vmatprep.subr.mxu0 0.0
      %499 = vmatpush1.msra.mxu0 %v476
      %500 = vmatprep.subr.mxu0 0.0
      %501 = vmatpush1.msra.mxu0 %v475
      %502 = vmatprep.subr.mxu0 0.0
      %503 = vmatpush1.msra.mxu0 %v474
      %504 = vmatprep.subr.mxu0 0.0
      %505 = vmatpush1.msra.mxu0 %v473
      %506 = vmatprep.subr.mxu0 0.0
      %507 = vmatpush1.msra.mxu0 %v472
      %508 = vmatprep.subr.mxu0 0.0
      %509 = vmatpush1.msra.mxu0 %v471
      %510 = vmatprep.subr.mxu0 0.0
      %511 = vmatpush1.msra.mxu0 %v470
      %512 = vmatprep.subr.mxu0 0.0
      %513 = vmatpush1.msra.mxu0 %v469
      %514 = vmatprep.subr.mxu0 0.0
      %515 = vmatpush1.msra.mxu0 %v468
      %516 = vmatprep.subr.mxu0 0.0
      %517 = vmatpush2.msra.mxu0 0.0
      %518 = vmatprep.subr.mxu0 0.0
      %519 = vmatpush2.msra.mxu0 0.0
      %520 = vmatprep.subr.mxu0 0.0
      %521 = vmatpush2.msra.mxu0 0.0
      %522 = vmatprep.subr.mxu0 0.0
      %523 = vmatpush2.msra.mxu0 0.0
      %524 = vmatprep.subr.mxu0 0.0
      %525 = vmatpush2.msra.mxu0 0.0
      %526 = vmatprep.subr.mxu0 0.0
      %527 = vmatpush2.msra.mxu0 0.0
      %528 = vmatprep.subr.mxu0 0.0
      %529 = vmatpush2.msra.mxu0 0.0
      %530 = vmatprep.subr.mxu0 0.0
      %531 = vmatpush2.msra.mxu0 0.0
      %532 = vmatprep.subr.mxu0 0.0
      %533 = vmatpush2.msra.mxu0 0.0
      %534 = vmatprep.subr.mxu0 0.0
      %535 = vmatpush2.msra.mxu0 0.0
      %536 = vmatprep.subr.mxu0 0.0
      %537 = vmatpush2.msra.mxu0 0.0
      %538 = vmatprep.subr.mxu0 0.0
      %539 = vmatpush2.msra.mxu0 0.0
      %540 = vmatprep.subr.mxu0 0.0
      %541 = vmatpush2.msra.mxu0 0.0
      %542 = vmatprep.subr.mxu0 0.0
      %543 = vmatpush2.msra.mxu0 0.0
      %544 = vmatprep.subr.mxu0 0.0
      %545 = vmatpush2.msra.mxu0 0.0
      %546 = vmatprep.subr.mxu0 0.0
      %547 = vmatpush2.msra.mxu0 0.0
      %548 = vmatprep.mubr.f32.mxu0 0.0
      %549 = vmatmul.mubr.f32.gmra.mxu0 %v463
      %v550 = vpop.f32.mrf.mxu0
      %v551 = vadd.f32 0.0, %v550
      %v552 = vpop.f32.mrf.mxu0
      %553 = vdwg.mxu0
      %v554 = vadd.f32 %v467, %v551
      %v555 = vtanh.pop %v554
      %v556 = vld [vmem:[%s4] sm:$0xff]
      %v557 = vld [vmem:[%s4 + $0x8] sm:$0xff]
      %v558 = vld [vmem:[%s4 + $0x10] sm:$0xff]
      %v559 = vld [vmem:[%s4 + $0x18] sm:$0xff]
      %v560 = vld [vmem:[%s4 + $0x20] sm:$0xff]
      %v561 = vld [vmem:[%s4 + $0x28] sm:$0xff]
      %v562 = vld [vmem:[%s4 + $0x30] sm:$0xff]
      %v563 = vld [vmem:[%s4 + $0x38] sm:$0xff]
      %v564 = vld [vmem:[%s4 + $0x40] sm:$0xff]
      %v565 = vld [vmem:[%s4 + $0x48] sm:$0xff]
      %v566 = vld [vmem:[%s4 + $0x50] sm:$0xff]
      %v567 = vld [vmem:[%s4 + $0x58] sm:$0xff]
      %v568 = vld [vmem:[%s4 + $0x60] sm:$0xff]
      %v569 = vld [vmem:[%s4 + $0x68] sm:$0xff]
      %v570 = vld [vmem:[%s4 + $0x70] sm:$0xff]
      %v571 = vld [vmem:[%s4 + $0x78] sm:$0xff]
      %v572 = vld [vmem:[%s5] sm:$0xff]
      %v573 = vld [vmem:[%s5 + $0x8] sm:$0xff]
      %v574 = vld [vmem:[%s5 + $0x10] sm:$0xff]
      %v575 = vld [vmem:[%s5 + $0x18] sm:$0xff]
      %v576 = vld [vmem:[%s5 + $0x20] sm:$0xff]
      %v577 = vld [vmem:[%s5 + $0x28] sm:$0xff]
      %v578 = vld [vmem:[%s5 + $0x30] sm:$0xff]
      %v579 = vld [vmem:[%s5 + $0x38] sm:$0xff]
      %v580 = vld [vmem:[%s5 + $0x40] sm:$0xff]
      %v581 = vld [vmem:[%s5 + $0x48] sm:$0xff]
      %v582 = vld [vmem:[%s5 + $0x50] sm:$0xff]
      %v583 = vld [vmem:[%s5 + $0x58] sm:$0xff]
      %v584 = vld [vmem:[%s5 + $0x60] sm:$0xff]
      %v585 = vld [vmem:[%s5 + $0x68] sm:$0xff]
      %v586 = vld [vmem:[%s5 + $0x70] sm:$0xff]
      %v587 = vld [vmem:[%s5 + $0x78] sm:$0xff]
      %588 = vmatprep.subr.mxu0 0.0
      %589 = vmatpush1.msra.mxu0 %v587
      %590 = vmatprep.subr.mxu0 0.0
      %591 = vmatpush1.msra.mxu0 %v586
      %592 = vmatprep.subr.mxu0 0.0
      %593 = vmatpush1.msra.mxu0 %v585
      %594 = vmatprep.subr.mxu0 0.0
      %595 = vmatpush1.msra.mxu0 %v584
      %596 = vmatprep.subr.mxu0 0.0
      %597 = vmatpush1.msra.mxu0 %v583
      %598 = vmatprep.subr.mxu0 0.0
      %599 = vmatpush1.msra.mxu0 %v582
      %600 = vmatprep.subr.mxu0 0.0
      %601 = vmatpush1.msra.mxu0 %v581
      %602 = vmatprep.subr.mxu0 0.0
      %603 = vmatpush1.msra.mxu0 %v580
      %604 = vmatprep.subr.mxu0 0.0
      %605 = vmatpush1.msra.mxu0 %v579
      %606 = vmatprep.subr.mxu0 0.0
      %607 = vmatpush1.msra.mxu0 %v578
      %608 = vmatprep.subr.mxu0 0.0
      %609 = vmatpush1.msra.mxu0 %v577
      %610 = vmatprep.subr.mxu0 0.0
      %611 = vmatpush1.msra.mxu0 %v576
      %612 = vmatprep.subr.mxu0 0.0
      %613 = vmatpush1.msra.mxu0 %v575
      %614 = vmatprep.subr.mxu0 0.0
      %615 = vmatpush1.msra.mxu0 %v574
      %616 = vmatprep.subr.mxu0 0.0
      %617 = vmatpush1.msra.mxu0 %v573
      %618 = vmatprep.subr.mxu0 0.0
      %619 = vmatpush1.msra.mxu0 %v572
      %620 = vmatprep.subr.mxu0 0.0
      %621 = vmatpush2.msra.mxu0 0.0
      %622 = vmatprep.subr.mxu0 0.0
      %623 = vmatpush2.msra.mxu0 0.0
      %624 = vmatprep.subr.mxu0 0.0
      %625 = vmatpush2.msra.mxu0 0.0
      %626 = vmatprep.subr.mxu0 0.0
      %627 = vmatpush2.msra.mxu0 0.0
      %628 = vmatprep.subr.mxu0 0.0
      %629 = vmatpush2.msra.mxu0 0.0
      %630 = vmatprep.subr.mxu0 0.0
      %631 = vmatpush2.msra.mxu0 0.0
      %632 = vmatprep.subr.mxu0 0.0
      %633 = vmatpush2.msra.mxu0 0.0
      %634 = vmatprep.subr.mxu0 0.0
      %635 = vmatpush2.msra.mxu0 0.0
      %636 = vmatprep.subr.mxu0 0.0
      %637 = vmatpush2.msra.mxu0 0.0
      %638 = vmatprep.subr.mxu0 0.0
      %639 = vmatpush2.msra.mxu0 0.0
      %640 = vmatprep.subr.mxu0 0.0
      %641 = vmatpush2.msra.mxu0 0.0
      %642 = vmatprep.subr.mxu0 0.0
      %643 = vmatpush2.msra.mxu0 0.0
      %644 = vmatprep.subr.mxu0 0.0
      %645 = vmatpush2.msra.mxu0 0.0
      %646 = vmatprep.subr.mxu0 0.0
      %647 = vmatpush2.msra.mxu0 0.0
      %648 = vmatprep.subr.mxu0 0.0
      %649 = vmatpush2.msra.mxu0 0.0
      %650 = vmatprep.subr.mxu0 0.0
      %651 = vmatpush2.msra.mxu0 0.0
      %652 = vmatprep.mubr.f32.mxu0 0.0
      %653 = vmatmul.mubr.f32.gmra.mxu0 %v465
      %v654 = vpop.f32.mrf.mxu0
      %v655 = vadd.f32 0.0, %v654
      %v656 = vpop.f32.mrf.mxu0
      %657 = vdwg.mxu0
      %658 = vmatprep.subr.mxu0 0.0
      %659 = vmatpush1.msra.mxu0 %v571
      %660 = vmatprep.subr.mxu0 0.0
      %661 = vmatpush1.msra.mxu0 %v570
      %662 = vmatprep.subr.mxu0 0.0
      %663 = vmatpush1.msra.mxu0 %v569
      %664 = vmatprep.subr.mxu0 0.0
      %665 = vmatpush1.msra.mxu0 %v568
      %666 = vmatprep.subr.mxu0 0.0
      %667 = vmatpush1.msra.mxu0 %v567
      %668 = vmatprep.subr.mxu0 0.0
      %669 = vmatpush1.msra.mxu0 %v566
      %670 = vmatprep.subr.mxu0 0.0
      %671 = vmatpush1.msra.mxu0 %v565
      %672 = vmatprep.subr.mxu0 0.0
      %673 = vmatpush1.msra.mxu0 %v564
      %674 = vmatprep.subr.mxu0 0.0
      %675 = vmatpush1.msra.mxu0 %v563
      %676 = vmatprep.subr.mxu0 0.0
      %677 = vmatpush1.msra.mxu0 %v562
      %678 = vmatprep.subr.mxu0 0.0
      %679 = vmatpush1.msra.mxu0 %v561
      %680 = vmatprep.subr.mxu0 0.0
      %681 = vmatpush1.msra.mxu0 %v560
      %682 = vmatprep.subr.mxu0 0.0
      %683 = vmatpush1.msra.mxu0 %v559
      %684 = vmatprep.subr.mxu0 0.0
      %685 = vmatpush1.msra.mxu0 %v558
      %686 = vmatprep.subr.mxu0 0.0
      %687 = vmatpush1.msra.mxu0 %v557
      %688 = vmatprep.subr.mxu0 0.0
      %689 = vmatpush1.msra.mxu0 %v556
      %690 = vmatprep.subr.mxu0 0.0
      %691 = vmatpush2.msra.mxu0 0.0
      %692 = vmatprep.subr.mxu0 0.0
      %693 = vmatpush2.msra.mxu0 0.0
      %694 = vmatprep.subr.mxu0 0.0
      %695 = vmatpush2.msra.mxu0 0.0
      %696 = vmatprep.subr.mxu0 0.0
      %697 = vmatpush2.msra.mxu0 0.0
      %698 = vmatprep.subr.mxu0 0.0
      %699 = vmatpush2.msra.mxu0 0.0
      %700 = vmatprep.subr.mxu0 0.0
      %701 = vmatpush2.msra.mxu0 0.0
      %702 = vmatprep.subr.mxu0 0.0
      %703 = vmatpush2.msra.mxu0 0.0
      %704 = vmatprep.subr.mxu0 0.0
      %705 = vmatpush2.msra.mxu0 0.0
      %706 = vmatprep.subr.mxu0 0.0
      %707 = vmatpush2.msra.mxu0 0.0
      %708 = vmatprep.subr.mxu0 0.0
      %709 = vmatpush2.msra.mxu0 0.0
      %710 = vmatprep.subr.mxu0 0.0
      %711 = vmatpush2.msra.mxu0 0.0
      %712 = vmatprep.subr.mxu0 0.0
      %713 = vmatpush2.msra.mxu0 0.0
      %714 = vmatprep.subr.mxu0 0.0
      %715 = vmatpush2.msra.mxu0 0.0
      %716 = vmatprep.subr.mxu0 0.0
      %717 = vmatpush2.msra.mxu0 0.0
      %718 = vmatprep.subr.mxu0 0.0
      %719 = vmatpush2.msra.mxu0 0.0
      %720 = vmatprep.subr.mxu0 0.0
      %721 = vmatpush2.msra.mxu0 0.0
      %722 = vmatprep.mubr.f32.mxu0 0.0
      %723 = vmatmul.mubr.f32.gmra.mxu0 %v555
      %v724 = vpop.f32.mrf.mxu0
      %v725 = vadd.f32 %v655, %v724
      %v726 = vpop.f32.mrf.mxu0
      %727 = vdwg.mxu0
      %v728 = vadd.f32 %v725, %v461
      %v729 = vtanh.pop %v728
      %p730 = scmp.lt.s32.totalorder %s466, 8
      %s731 = scalar_select %p730, 1, 0
      %v732 = vstv %s731
      %vm733 = vcmp.eq.s32.totalorder %v732, 1
      %v734 = vsel %vm733, %v555, %v463
      %v735 = vsel %vm733, %v729, %v465
      %s736 = scalar_lea.vmem [#allocation2], 8
      %v737 = vld [vmem:[%s736] sm:$0xff]
      %738 = vmatprep.subr.mxu0 0.0
      %739 = vmatpush1.msra.mxu0 %v483
      %740 = vmatprep.subr.mxu0 0.0
      %741 = vmatpush1.msra.mxu0 %v482
      %742 = vmatprep.subr.mxu0 0.0
      %743 = vmatpush1.msra.mxu0 %v481
      %744 = vmatprep.subr.mxu0 0.0
      %745 = vmatpush1.msra.mxu0 %v480
      %746 = vmatprep.subr.mxu0 0.0
      %747 = vmatpush1.msra.mxu0 %v479
      %748 = vmatprep.subr.mxu0 0.0
      %749 = vmatpush1.msra.mxu0 %v478
      %750 = vmatprep.subr.mxu0 0.0
      %751 = vmatpush1.msra.mxu0 %v477
      %752 = vmatprep.subr.mxu0 0.0
      %753 = vmatpush1.msra.mxu0 %v476
      %754 = vmatprep.subr.mxu0 0.0
      %755 = vmatpush1.msra.mxu0 %v475
      %756 = vmatprep.subr.mxu0 0.0
      %757 = vmatpush1.msra.mxu0 %v474
      %758 = vmatprep.subr.mxu0 0.0
      %759 = vmatpush1.msra.mxu0 %v473
      %760 = vmatprep.subr.mxu0 0.0
      %761 = vmatpush1.msra.mxu0 %v472
      %762 = vmatprep.subr.mxu0 0.0
      %763 = vmatpush1.msra.mxu0 %v471
      %764 = vmatprep.subr.mxu0 0.0
      %765 = vmatpush1.msra.mxu0 %v470
      %766 = vmatprep.subr.mxu0 0.0
      %767 = vmatpush1.msra.mxu0 %v469
      %768 = vmatprep.subr.mxu0 0.0
      %769 = vmatpush1.msra.mxu0 %v468
      %770 = vmatprep.subr.mxu0 0.0
      %771 = vmatpush2.msra.mxu0 0.0
      %772 = vmatprep.subr.mxu0 0.0
      %773 = vmatpush2.msra.mxu0 0.0
      %774 = vmatprep.subr.mxu0 0.0
      %775 = vmatpush2.msra.mxu0 0.0
      %776 = vmatprep.subr.mxu0 0.0
      %777 = vmatpush2.msra.mxu0 0.0
      %778 = vmatprep.subr.mxu0 0.0
      %779 = vmatpush2.msra.mxu0 0.0
      %780 = vmatprep.subr.mxu0 0.0
      %781 = vmatpush2.msra.mxu0 0.0
      %782 = vmatprep.subr.mxu0 0.0
      %783 = vmatpush2.msra.mxu0 0.0
      %784 = vmatprep.subr.mxu0 0.0
      %785 = vmatpush2.msra.mxu0 0.0
      %786 = vmatprep.subr.mxu0 0.0
      %787 = vmatpush2.msra.mxu0 0.0
      %788 = vmatprep.subr.mxu0 0.0
      %789 = vmatpush2.msra.mxu0 0.0
      %790 = vmatprep.subr.mxu0 0.0
      %791 = vmatpush2.msra.mxu0 0.0
      %792 = vmatprep.subr.mxu0 0.0
      %793 = vmatpush2.msra.mxu0 0.0
      %794 = vmatprep.subr.mxu0 0.0
      %795 = vmatpush2.msra.mxu0 0.0
      %796 = vmatprep.subr.mxu0 0.0
      %797 = vmatpush2.msra.mxu0 0.0
      %798 = vmatprep.subr.mxu0 0.0
      %799 = vmatpush2.msra.mxu0 0.0
      %800 = vmatprep.subr.mxu0 0.0
      %801 = vmatpush2.msra.mxu0 0.0
      %802 = vmatprep.mubr.f32.mxu0 0.0
      %803 = vmatmul.mubr.f32.gmra.mxu0 %v734
      %v804 = vpop.f32.mrf.mxu0
      %v805 = vadd.f32 0.0, %v804
      %v806 = vpop.f32.mrf.mxu0
      %807 = vdwg.mxu0
      %v808 = vadd.f32 %v737, %v805
      %v809 = vtanh.pop %v808
      %810 = vmatprep.subr.mxu0 0.0
      %811 = vmatpush1.msra.mxu0 %v587
      %812 = vmatprep.subr.mxu0 0.0
      %813 = vmatpush1.msra.mxu0 %v586
      %814 = vmatprep.subr.mxu0 0.0
      %815 = vmatpush1.msra.mxu0 %v585
      %816 = vmatprep.subr.mxu0 0.0
      %817 = vmatpush1.msra.mxu0 %v584
      %818 = vmatprep.subr.mxu0 0.0
      %819 = vmatpush1.msra.mxu0 %v583
      %820 = vmatprep.subr.mxu0 0.0
      %821 = vmatpush1.msra.mxu0 %v582
      %822 = vmatprep.subr.mxu0 0.0
      %823 = vmatpush1.msra.mxu0 %v581
      %824 = vmatprep.subr.mxu0 0.0
      %825 = vmatpush1.msra.mxu0 %v580
      %826 = vmatprep.subr.mxu0 0.0
      %827 = vmatpush1.msra.mxu0 %v579
      %828 = vmatprep.subr.mxu0 0.0
      %829 = vmatpush1.msra.mxu0 %v578
      %830 = vmatprep.subr.mxu0 0.0
      %831 = vmatpush1.msra.mxu0 %v577
      %832 = vmatprep.subr.mxu0 0.0
      %833 = vmatpush1.msra.mxu0 %v576
      %834 = vmatprep.subr.mxu0 0.0
      %835 = vmatpush1.msra.mxu0 %v575
      %836 = vmatprep.subr.mxu0 0.0
      %837 = vmatpush1.msra.mxu0 %v574
      %838 = vmatprep.subr.mxu0 0.0
      %839 = vmatpush1.msra.mxu0 %v573
      %840 = vmatprep.subr.mxu0 0.0
      %841 = vmatpush1.msra.mxu0 %v572
      %842 = vmatprep.subr.mxu0 0.0
      %843 = vmatpush2.msra.mxu0 0.0
      %844 = vmatprep.subr.mxu0 0.0
      %845 = vmatpush2.msra.mxu0 0.0
      %846 = vmatprep.subr.mxu0 0.0
      %847 = vmatpush2.msra.mxu0 0.0
      %848 = vmatprep.subr.mxu0 0.0
      %849 = vmatpush2.msra.mxu0 0.0
      %850 = vmatprep.subr.mxu0 0.0
      %851 = vmatpush2.msra.mxu0 0.0
      %852 = vmatprep.subr.mxu0 0.0
      %853 = vmatpush2.msra.mxu0 0.0
      %854 = vmatprep.subr.mxu0 0.0
      %855 = vmatpush2.msra.mxu0 0.0
      %856 = vmatprep.subr.mxu0 0.0
      %857 = vmatpush2.msra.mxu0 0.0
      %858 = vmatprep.subr.mxu0 0.0
      %859 = vmatpush2.msra.mxu0 0.0
      %860 = vmatprep.subr.mxu0 0.0
      %861 = vmatpush2.msra.mxu0 0.0
      %862 = vmatprep.subr.mxu0 0.0
      %863 = vmatpush2.msra.mxu0 0.0
      %864 = vmatprep.subr.mxu0 0.0
      %865 = vmatpush2.msra.mxu0 0.0
      %866 = vmatprep.subr.mxu0 0.0
      %867 = vmatpush2.msra.mxu0 0.0
      %868 = vmatprep.subr.mxu0 0.0
      %869 = vmatpush2.msra.mxu0 0.0
      %870 = vmatprep.subr.mxu0 0.0
      %871 = vmatpush2.msra.mxu0 0.0
      %872 = vmatprep.subr.mxu0 0.0
      %873 = vmatpush2.msra.mxu0 0.0
      %874 = vmatprep.mubr.f32.mxu0 0.0
      %875 = vmatmul.mubr.f32.gmra.mxu0 %v735
      %v876 = vpop.f32.mrf.mxu0
      %v877 = vadd.f32 0.0, %v876
      %v878 = vpop.f32.mrf.mxu0
      %879 = vdwg.mxu0
      %880 = vmatprep.subr.mxu0 0.0
      %881 = vmatpush1.msra.mxu0 %v571
      %882 = vmatprep.subr.mxu0 0.0
      %883 = vmatpush1.msra.mxu0 %v570
      %884 = vmatprep.subr.mxu0 0.0
      %885 = vmatpush1.msra.mxu0 %v569
      %886 = vmatprep.subr.mxu0 0.0
      %887 = vmatpush1.msra.mxu0 %v568
      %888 = vmatprep.subr.mxu0 0.0
      %889 = vmatpush1.msra.mxu0 %v567
      %890 = vmatprep.subr.mxu0 0.0
      %891 = vmatpush1.msra.mxu0 %v566
      %892 = vmatprep.subr.mxu0 0.0
      %893 = vmatpush1.msra.mxu0 %v565
      %894 = vmatprep.subr.mxu0 0.0
      %895 = vmatpush1.msra.mxu0 %v564
      %896 = vmatprep.subr.mxu0 0.0
      %897 = vmatpush1.msra.mxu0 %v563
      %898 = vmatprep.subr.mxu0 0.0
      %899 = vmatpush1.msra.mxu0 %v562
      %900 = vmatprep.subr.mxu0 0.0
      %901 = vmatpush1.msra.mxu0 %v561
      %902 = vmatprep.subr.mxu0 0.0
      %903 = vmatpush1.msra.mxu0 %v560
      %904 = vmatprep.subr.mxu0 0.0
      %905 = vmatpush1.msra.mxu0 %v559
      %906 = vmatprep.subr.mxu0 0.0
      %907 = vmatpush1.msra.mxu0 %v558
      %908 = vmatprep.subr.mxu0 0.0
      %909 = vmatpush1.msra.mxu0 %v557
      %910 = vmatprep.subr.mxu0 0.0
      %911 = vmatpush1.msra.mxu0 %v556
      %912 = vmatprep.subr.mxu0 0.0
      %913 = vmatpush2.msra.mxu0 0.0
      %914 = vmatprep.subr.mxu0 0.0
      %915 = vmatpush2.msra.mxu0 0.0
      %916 = vmatprep.subr.mxu0 0.0
      %917 = vmatpush2.msra.mxu0 0.0
      %918 = vmatprep.subr.mxu0 0.0
      %919 = vmatpush2.msra.mxu0 0.0
      %920 = vmatprep.subr.mxu0 0.0
      %921 = vmatpush2.msra.mxu0 0.0
      %922 = vmatprep.subr.mxu0 0.0
      %923 = vmatpush2.msra.mxu0 0.0
      %924 = vmatprep.subr.mxu0 0.0
      %925 = vmatpush2.msra.mxu0 0.0
      %926 = vmatprep.subr.mxu0 0.0
      %927 = vmatpush2.msra.mxu0 0.0
      %928 = vmatprep.subr.mxu0 0.0
      %929 = vmatpush2.msra.mxu0 0.0
      %930 = vmatprep.subr.mxu0 0.0
      %931 = vmatpush2.msra.mxu0 0.0
      %932 = vmatprep.subr.mxu0 0.0
      %933 = vmatpush2.msra.mxu0 0.0
      %934 = vmatprep.subr.mxu0 0.0
      %935 = vmatpush2.msra.mxu0 0.0
      %936 = vmatprep.subr.mxu0 0.0
      %937 = vmatpush2.msra.mxu0 0.0
      %938 = vmatprep.subr.mxu0 0.0
      %939 = vmatpush2.msra.mxu0 0.0
      %940 = vmatprep.subr.mxu0 0.0
      %941 = vmatpush2.msra.mxu0 0.0
      %942 = vmatprep.subr.mxu0 0.0
      %943 = vmatpush2.msra.mxu0 0.0
      %944 = vmatprep.mubr.f32.mxu0 0.0
      %945 = vmatmul.mubr.f32.gmra.mxu0 %v809
      %v946 = vpop.f32.mrf.mxu0
      %v947 = vadd.f32 %v877, %v946
      %v948 = vpop.f32.mrf.mxu0
      %949 = vdwg.mxu0
      %v950 = vadd.f32 %v947, %v461
      %v951 = vtanh.pop %v950
      %s952 = sadd.s32 %s466, 1
      %p953 = scmp.lt.s32.totalorder %s952, 8
      %s954 = scalar_select %p953, 1, 0
      %v955 = vstv %s954
      %vm956 = vcmp.eq.s32.totalorder %v955, 1
      %v957 = vsel %vm956, %v809, %v734
      %v958 = vsel %vm956, %v951, %v735
      %s959 = scalar_lea.vmem [#allocation2], 16
      %v960 = vld [vmem:[%s959] sm:$0xff]
      %961 = vmatprep.subr.mxu0 0.0
      %962 = vmatpush1.msra.mxu0 %v483
      %963 = vmatprep.subr.mxu0 0.0
      %964 = vmatpush1.msra.mxu0 %v482
      %965 = vmatprep.subr.mxu0 0.0
      %966 = vmatpush1.msra.mxu0 %v481
      %967 = vmatprep.subr.mxu0 0.0
      %968 = vmatpush1.msra.mxu0 %v480
      %969 = vmatprep.subr.mxu0 0.0
      %970 = vmatpush1.msra.mxu0 %v479
      %971 = vmatprep.subr.mxu0 0.0
      %972 = vmatpush1.msra.mxu0 %v478
      %973 = vmatprep.subr.mxu0 0.0
      %974 = vmatpush1.msra.mxu0 %v477
      %975 = vmatprep.subr.mxu0 0.0
      %976 = vmatpush1.msra.mxu0 %v476
      %977 = vmatprep.subr.mxu0 0.0
      %978 = vmatpush1.msra.mxu0 %v475
      %979 = vmatprep.subr.mxu0 0.0
      %980 = vmatpush1.msra.mxu0 %v474
      %981 = vmatprep.subr.mxu0 0.0
      %982 = vmatpush1.msra.mxu0 %v473
      %983 = vmatprep.subr.mxu0 0.0
      %984 = vmatpush1.msra.mxu0 %v472
      %985 = vmatprep.subr.mxu0 0.0
      %986 = vmatpush1.msra.mxu0 %v471
      %987 = vmatprep.subr.mxu0 0.0
      %988 = vmatpush1.msra.mxu0 %v470
      %989 = vmatprep.subr.mxu0 0.0
      %990 = vmatpush1.msra.mxu0 %v469
      %991 = vmatprep.subr.mxu0 0.0
      %992 = vmatpush1.msra.mxu0 %v468
      %993 = vmatprep.subr.mxu0 0.0
      %994 = vmatpush2.msra.mxu0 0.0
      %995 = vmatprep.subr.mxu0 0.0
      %996 = vmatpush2.msra.mxu0 0.0
      %997 = vmatprep.subr.mxu0 0.0
      %998 = vmatpush2.msra.mxu0 0.0
      %999 = vmatprep.subr.mxu0 0.0
      %1000 = vmatpush2.msra.mxu0 0.0
      %1001 = vmatprep.subr.mxu0 0.0
      %1002 = vmatpush2.msra.mxu0 0.0
      %1003 = vmatprep.subr.mxu0 0.0
      %1004 = vmatpush2.msra.mxu0 0.0
      %1005 = vmatprep.subr.mxu0 0.0
      %1006 = vmatpush2.msra.mxu0 0.0
      %1007 = vmatprep.subr.mxu0 0.0
      %1008 = vmatpush2.msra.mxu0 0.0
      %1009 = vmatprep.subr.mxu0 0.0
      %1010 = vmatpush2.msra.mxu0 0.0
      %1011 = vmatprep.subr.mxu0 0.0
      %1012 = vmatpush2.msra.mxu0 0.0
      %1013 = vmatprep.subr.mxu0 0.0
      %1014 = vmatpush2.msra.mxu0 0.0
      %1015 = vmatprep.subr.mxu0 0.0
      %1016 = vmatpush2.msra.mxu0 0.0
      %1017 = vmatprep.subr.mxu0 0.0
      %1018 = vmatpush2.msra.mxu0 0.0
      %1019 = vmatprep.subr.mxu0 0.0
      %1020 = vmatpush2.msra.mxu0 0.0
      %1021 = vmatprep.subr.mxu0 0.0
      %1022 = vmatpush2.msra.mxu0 0.0
      %1023 = vmatprep.subr.mxu0 0.0
      %1024 = vmatpush2.msra.mxu0 0.0
      %1025 = vmatprep.mubr.f32.mxu0 0.0
      %1026 = vmatmul.mubr.f32.gmra.mxu0 %v957
      %v1027 = vpop.f32.mrf.mxu0
      %v1028 = vadd.f32 0.0, %v1027
      %v1029 = vpop.f32.mrf.mxu0
      %1030 = vdwg.mxu0
      %v1031 = vadd.f32 %v960, %v1028
      %v1032 = vtanh.pop %v1031
      %1033 = vmatprep.subr.mxu0 0.0
      %1034 = vmatpush1.msra.mxu0 %v587
      %1035 = vmatprep.subr.mxu0 0.0
      %1036 = vmatpush1.msra.mxu0 %v586
      %1037 = vmatprep.subr.mxu0 0.0
      %1038 = vmatpush1.msra.mxu0 %v585
      %1039 = vmatprep.subr.mxu0 0.0
      %1040 = vmatpush1.msra.mxu0 %v584
      %1041 = vmatprep.subr.mxu0 0.0
      %1042 = vmatpush1.msra.mxu0 %v583
      %1043 = vmatprep.subr.mxu0 0.0
      %1044 = vmatpush1.msra.mxu0 %v582
      %1045 = vmatprep.subr.mxu0 0.0
      %1046 = vmatpush1.msra.mxu0 %v581
      %1047 = vmatprep.subr.mxu0 0.0
      %1048 = vmatpush1.msra.mxu0 %v580
      %1049 = vmatprep.subr.mxu0 0.0
      %1050 = vmatpush1.msra.mxu0 %v579
      %1051 = vmatprep.subr.mxu0 0.0
      %1052 = vmatpush1.msra.mxu0 %v578
      %1053 = vmatprep.subr.mxu0 0.0
      %1054 = vmatpush1.msra.mxu0 %v577
      %1055 = vmatprep.subr.mxu0 0.0
      %1056 = vmatpush1.msra.mxu0 %v576
      %1057 = vmatprep.subr.mxu0 0.0
      %1058 = vmatpush1.msra.mxu0 %v575
      %1059 = vmatprep.subr.mxu0 0.0
      %1060 = vmatpush1.msra.mxu0 %v574
      %1061 = vmatprep.subr.mxu0 0.0
      %1062 = vmatpush1.msra.mxu0 %v573
      %1063 = vmatprep.subr.mxu0 0.0
      %1064 = vmatpush1.msra.mxu0 %v572
      %1065 = vmatprep.subr.mxu0 0.0
      %1066 = vmatpush2.msra.mxu0 0.0
      %1067 = vmatprep.subr.mxu0 0.0
      %1068 = vmatpush2.msra.mxu0 0.0
      %1069 = vmatprep.subr.mxu0 0.0
      %1070 = vmatpush2.msra.mxu0 0.0
      %1071 = vmatprep.subr.mxu0 0.0
      %1072 = vmatpush2.msra.mxu0 0.0
      %1073 = vmatprep.subr.mxu0 0.0
      %1074 = vmatpush2.msra.mxu0 0.0
      %1075 = vmatprep.subr.mxu0 0.0
      %1076 = vmatpush2.msra.mxu0 0.0
      %1077 = vmatprep.subr.mxu0 0.0
      %1078 = vmatpush2.msra.mxu0 0.0
      %1079 = vmatprep.subr.mxu0 0.0
      %1080 = vmatpush2.msra.mxu0 0.0
      %1081 = vmatprep.subr.mxu0 0.0
      %1082 = vmatpush2.msra.mxu0 0.0
      %1083 = vmatprep.subr.mxu0 0.0
      %1084 = vmatpush2.msra.mxu0 0.0
      %1085 = vmatprep.subr.mxu0 0.0
      %1086 = vmatpush2.msra.mxu0 0.0
      %1087 = vmatprep.subr.mxu0 0.0
      %1088 = vmatpush2.msra.mxu0 0.0
      %1089 = vmatprep.subr.mxu0 0.0
      %1090 = vmatpush2.msra.mxu0 0.0
      %1091 = vmatprep.subr.mxu0 0.0
      %1092 = vmatpush2.msra.mxu0 0.0
      %1093 = vmatprep.subr.mxu0 0.0
      %1094 = vmatpush2.msra.mxu0 0.0
      %1095 = vmatprep.subr.mxu0 0.0
      %1096 = vmatpush2.msra.mxu0 0.0
      %1097 = vmatprep.mubr.f32.mxu0 0.0
      %1098 = vmatmul.mubr.f32.gmra.mxu0 %v958
      %v1099 = vpop.f32.mrf.mxu0
      %v1100 = vadd.f32 0.0, %v1099
      %v1101 = vpop.f32.mrf.mxu0
      %1102 = vdwg.mxu0
      %1103 = vmatprep.subr.mxu0 0.0
      %1104 = vmatpush1.msra.mxu0 %v571
      %1105 = vmatprep.subr.mxu0 0.0
      %1106 = vmatpush1.msra.mxu0 %v570
      %1107 = vmatprep.subr.mxu0 0.0
      %1108 = vmatpush1.msra.mxu0 %v569
      %1109 = vmatprep.subr.mxu0 0.0
      %1110 = vmatpush1.msra.mxu0 %v568
      %1111 = vmatprep.subr.mxu0 0.0
      %1112 = vmatpush1.msra.mxu0 %v567
      %1113 = vmatprep.subr.mxu0 0.0
      %1114 = vmatpush1.msra.mxu0 %v566
      %1115 = vmatprep.subr.mxu0 0.0
      %1116 = vmatpush1.msra.mxu0 %v565
      %1117 = vmatprep.subr.mxu0 0.0
      %1118 = vmatpush1.msra.mxu0 %v564
      %1119 = vmatprep.subr.mxu0 0.0
      %1120 = vmatpush1.msra.mxu0 %v563
      %1121 = vmatprep.subr.mxu0 0.0
      %1122 = vmatpush1.msra.mxu0 %v562
      %1123 = vmatprep.subr.mxu0 0.0
      %1124 = vmatpush1.msra.mxu0 %v561
      %1125 = vmatprep.subr.mxu0 0.0
      %1126 = vmatpush1.msra.mxu0 %v560
      %1127 = vmatprep.subr.mxu0 0.0
      %1128 = vmatpush1.msra.mxu0 %v559
      %1129 = vmatprep.subr.mxu0 0.0
      %1130 = vmatpush1.msra.mxu0 %v558
      %1131 = vmatprep.subr.mxu0 0.0
      %1132 = vmatpush1.msra.mxu0 %v557
      %1133 = vmatprep.subr.mxu0 0.0
      %1134 = vmatpush1.msra.mxu0 %v556
      %1135 = vmatprep.subr.mxu0 0.0
      %1136 = vmatpush2.msra.mxu0 0.0
      %1137 = vmatprep.subr.mxu0 0.0
      %1138 = vmatpush2.msra.mxu0 0.0
      %1139 = vmatprep.subr.mxu0 0.0
      %1140 = vmatpush2.msra.mxu0 0.0
      %1141 = vmatprep.subr.mxu0 0.0
      %1142 = vmatpush2.msra.mxu0 0.0
      %1143 = vmatprep.subr.mxu0 0.0
      %1144 = vmatpush2.msra.mxu0 0.0
      %1145 = vmatprep.subr.mxu0 0.0
      %1146 = vmatpush2.msra.mxu0 0.0
      %1147 = vmatprep.subr.mxu0 0.0
      %1148 = vmatpush2.msra.mxu0 0.0
      %1149 = vmatprep.subr.mxu0 0.0
      %1150 = vmatpush2.msra.mxu0 0.0
      %1151 = vmatprep.subr.mxu0 0.0
      %1152 = vmatpush2.msra.mxu0 0.0
      %1153 = vmatprep.subr.mxu0 0.0
      %1154 = vmatpush2.msra.mxu0 0.0
      %1155 = vmatprep.subr.mxu0 0.0
      %1156 = vmatpush2.msra.mxu0 0.0
      %1157 = vmatprep.subr.mxu0 0.0
      %1158 = vmatpush2.msra.mxu0 0.0
      %1159 = vmatprep.subr.mxu0 0.0
      %1160 = vmatpush2.msra.mxu0 0.0
      %1161 = vmatprep.subr.mxu0 0.0
      %1162 = vmatpush2.msra.mxu0 0.0
      %1163 = vmatprep.subr.mxu0 0.0
      %1164 = vmatpush2.msra.mxu0 0.0
      %1165 = vmatprep.subr.mxu0 0.0
      %1166 = vmatpush2.msra.mxu0 0.0
      %1167 = vmatprep.mubr.f32.mxu0 0.0
      %1168 = vmatmul.mubr.f32.gmra.mxu0 %v1032
      %v1169 = vpop.f32.mrf.mxu0
      %v1170 = vadd.f32 %v1100, %v1169
      %v1171 = vpop.f32.mrf.mxu0
      %1172 = vdwg.mxu0
      %v1173 = vadd.f32 %v1170, %v461
      %v1174 = vtanh.pop %v1173
      %s1175 = sadd.s32 %s466, 2
      %p1176 = scmp.lt.s32.totalorder %s1175, 8
      %s1177 = scalar_select %p1176, 1, 0
      %v1178 = vstv %s1177
      %vm1179 = vcmp.eq.s32.totalorder %v1178, 1
      %v1180 = vsel %vm1179, %v1032, %v957
      %v1181 = vsel %vm1179, %v1174, %v958
      %1182 = vst [vmem:[#allocation3] sm:$0xff] %v1180
      %1183 = vst [vmem:[%s464] sm:$0xff] %v1181
      %p1184 = scmp.eq.s32.totalorder %s22, 2
      // Predicated region
      $region61: #{rnn_model_forward.1} parent=55 // pred_check
        %p1185 = pneg %p1184
      $region62: #{rnn_model_forward.1} parent=55 // pred_check_branch
        %1187 = sbr.rel (%p1185) target = $region64
      $region63: #{rnn_model_forward.1} parent=55 // pred_region
        %1188 = vst [vmem:[%s10] sm:$0xff] %v1180
        %s1189 = scalar_lea.vmem %s10, 8
        %1190 = vst [vmem:[%s1189] sm:$0xff] %v1181
        %v1191 = vld [vmem:[%s7] sm:$0xff]
        %v1192 = vld [vmem:[%s7 + $0x8] sm:$0xff]
        %v1193 = vld [vmem:[%s7 + $0x10] sm:$0xff]
        %v1194 = vld [vmem:[%s7 + $0x18] sm:$0xff]
        %v1195 = vld [vmem:[%s7 + $0x20] sm:$0xff]
        %v1196 = vld [vmem:[%s7 + $0x28] sm:$0xff]
        %v1197 = vld [vmem:[%s7 + $0x30] sm:$0xff]
        %v1198 = vld [vmem:[%s7 + $0x38] sm:$0xff]
        %v1199 = vld [vmem:[%s7 + $0x40] sm:$0xff]
        %v1200 = vld [vmem:[%s7 + $0x48] sm:$0xff]
        %v1201 = vld [vmem:[%s7 + $0x50] sm:$0xff]
        %v1202 = vld [vmem:[%s7 + $0x58] sm:$0xff]
        %v1203 = vld [vmem:[%s7 + $0x60] sm:$0xff]
        %v1204 = vld [vmem:[%s7 + $0x68] sm:$0xff]
        %v1205 = vld [vmem:[%s7 + $0x70] sm:$0xff]
        %v1206 = vld [vmem:[%s7 + $0x78] sm:$0xff]
        %v1207 = vld [vmem:[%s8] sm:$0x1]
        %v1209 = vlaneseq
        %v1210 = vshrl.u32 %v1209, 7
        %v1211 = vsub.s32 0, %v1210
        %v1212 = vrot.slane %v1207, %v1211
        %1214 = vmatprep.subr.mxu0 0.0
        %1215 = vmatpush1.msra.mxu0 %v1206
        %1216 = vmatprep.subr.mxu0 0.0
        %1217 = vmatpush1.msra.mxu0 %v1205
        %1218 = vmatprep.subr.mxu0 0.0
        %1219 = vmatpush1.msra.mxu0 %v1204
        %1220 = vmatprep.subr.mxu0 0.0
        %1221 = vmatpush1.msra.mxu0 %v1203
        %1222 = vmatprep.subr.mxu0 0.0
        %1223 = vmatpush1.msra.mxu0 %v1202
        %1224 = vmatprep.subr.mxu0 0.0
        %1225 = vmatpush1.msra.mxu0 %v1201
        %1226 = vmatprep.subr.mxu0 0.0
        %1227 = vmatpush1.msra.mxu0 %v1200
        %1228 = vmatprep.subr.mxu0 0.0
        %1229 = vmatpush1.msra.mxu0 %v1199
        %1230 = vmatprep.subr.mxu0 0.0
        %1231 = vmatpush1.msra.mxu0 %v1198
        %1232 = vmatprep.subr.mxu0 0.0
        %1233 = vmatpush1.msra.mxu0 %v1197
        %1234 = vmatprep.subr.mxu0 0.0
        %1235 = vmatpush1.msra.mxu0 %v1196
        %1236 = vmatprep.subr.mxu0 0.0
        %1237 = vmatpush1.msra.mxu0 %v1195
        %1238 = vmatprep.subr.mxu0 0.0
        %1239 = vmatpush1.msra.mxu0 %v1194
        %1240 = vmatprep.subr.mxu0 0.0
        %1241 = vmatpush1.msra.mxu0 %v1193
        %1242 = vmatprep.subr.mxu0 0.0
        %1243 = vmatpush1.msra.mxu0 %v1192
        %1244 = vmatprep.subr.mxu0 0.0
        %1245 = vmatpush1.msra.mxu0 %v1191
        %1246 = vmatprep.subr.mxu0 0.0
        %1247 = vmatpush2.msra.mxu0 0.0
        %1248 = vmatprep.subr.mxu0 0.0
        %1249 = vmatpush2.msra.mxu0 0.0
        %1250 = vmatprep.subr.mxu0 0.0
        %1251 = vmatpush2.msra.mxu0 0.0
        %1252 = vmatprep.subr.mxu0 0.0
        %1253 = vmatpush2.msra.mxu0 0.0
        %1254 = vmatprep.subr.mxu0 0.0
        %1255 = vmatpush2.msra.mxu0 0.0
        %1256 = vmatprep.subr.mxu0 0.0
        %1257 = vmatpush2.msra.mxu0 0.0
        %1258 = vmatprep.subr.mxu0 0.0
        %1259 = vmatpush2.msra.mxu0 0.0
        %1260 = vmatprep.subr.mxu0 0.0
        %1261 = vmatpush2.msra.mxu0 0.0
        %1262 = vmatprep.subr.mxu0 0.0
        %1263 = vmatpush2.msra.mxu0 0.0
        %1264 = vmatprep.subr.mxu0 0.0
        %1265 = vmatpush2.msra.mxu0 0.0
        %1266 = vmatprep.subr.mxu0 0.0
        %1267 = vmatpush2.msra.mxu0 0.0
        %1268 = vmatprep.subr.mxu0 0.0
        %1269 = vmatpush2.msra.mxu0 0.0
        %1270 = vmatprep.subr.mxu0 0.0
        %1271 = vmatpush2.msra.mxu0 0.0
        %1272 = vmatprep.subr.mxu0 0.0
        %1273 = vmatpush2.msra.mxu0 0.0
        %1274 = vmatprep.subr.mxu0 0.0
        %1275 = vmatpush2.msra.mxu0 0.0
        %1276 = vmatprep.subr.mxu0 0.0
        %1277 = vmatpush2.msra.mxu0 0.0
        %1278 = vmatprep.mubr.f32.mxu0 0.0
        %1279 = vmatmul.mubr.f32.gmra.mxu0 %v1181
        %v1280 = vpop.f32.mrf.mxu0
        %v1281 = vadd.f32 %v1212, %v1280
        %v1282 = vpop.f32.mrf.mxu0
        %1283 = vdwg.mxu0
        %1284 = vst [vmem:[%s9] sm:$0xff] %v1281
      $region64: #{rnn_model_forward.1} parent=55 // pred_fallthru
        _
      // Predicated region
      $region65: #{rnn_model_forward.1} parent=55 // pred_check
        %p1285 = pneg %p229
      $region66: #{rnn_model_forward.1} parent=55 // pred_check_branch
        %1287 = sbr.rel (%p1285) target = $region68
      $region67: #{rnn_model_forward.1} parent=55 // pred_region
        _
      $region68: #{rnn_model_forward.1} parent=55 // pred_fallthru
        _
      // Predicated region
      $region69: #{rnn_model_forward.1} parent=55 // pred_check
        %p1288 = pneg %p250
      $region70: #{rnn_model_forward.1} parent=55 // pred_check_branch
        %1290 = sbr.rel (%p1288) target = $region72
      $region71: #{rnn_model_forward.1} parent=55 // pred_region
        _
      $region72: #{rnn_model_forward.1} parent=55 // pred_fallthru
        _
      // Predicated region
      $region73: #{rnn_model_forward.1} parent=55 // pred_check
        %p1291 = pneg %p229
      $region74: #{rnn_model_forward.1} parent=55 // pred_check_branch
        %1293 = sbr.rel (%p1291) target = $region76
      $region75: #{rnn_model_forward.1} parent=55 // pred_region
        _
      $region76: #{rnn_model_forward.1} parent=55 // pred_fallthru
        _
      // Predicated region
      $region77: #{rnn_model_forward.1} parent=55 // pred_check
        %p1294 = pneg %p250
      $region78: #{rnn_model_forward.1} parent=55 // pred_check_branch
        %1296 = sbr.rel (%p1294) target = $region80
      $region79: #{rnn_model_forward.1} parent=55 // pred_region
        _
      $region80: #{rnn_model_forward.1} parent=55 // pred_fallthru
        _
    $region56: #{rnn_model_forward.1} parent=5 // pred_fallthru
      _
    %p1297 = scmp.le.s32.totalorder 2, %s17
    // Predicated region
    $region81: #{rnn_model_forward.1} parent=5 // pred_check
      %p1298 = pneg %p1297
    $region82: #{rnn_model_forward.1} parent=5 // pred_check_branch
      %1300 = sbr.rel (%p1298) target = $region84
    $region83: #{rnn_model_forward.1} parent=5 // pred_region
      %s1301 = ssub.s32 %s17, 2
    $region84: #{rnn_model_forward.1} parent=5 // pred_fallthru
      _
  $region6: #{rnn_model_forward.1} parent=0 // loop_footer
    %s21 = sadd.s32 1, %s17
  $region7: #{rnn_model_forward.1} parent=0 // loop_footer_branch
    %16 = sbr.rel target = $region3
  $region8: #{rnn_model_forward.1} parent=0 // loop_exit
    _

</llo_original>
